<compile_context>
chip_gen: v5e
topology: v5e:2x2
jax: 0.10.0
libtpu: 0.0.40
codegen_flags: <defaults>
</compile_context>

<pallas_src>
import functools

import jax
import jax.numpy as jnp
from jax import lax
from jax.experimental import pallas as pl
from jax.experimental.pallas import tpu as pltpu


def _conv_bn_relu_kernel(x_ref, w_ref, bias_ref, o_ref, *, ksize, wp, n_out):
    """Fused Conv2d + folded-BN + ReLU for one batch element.

    The conv is evaluated at every padded-width column ("dense" columns), so a
    tap (kh, kw) is simply a contiguous window of the flattened spatial axis at
    offset kh*Wp + kw.  The few wrapped right-edge columns are discarded by the
    wrapper's final slice.

    x_ref:    (1, Cin, Lflat)   zero-padded input, spatial flattened   (VMEM)
    w_ref:    (K*K, Cout, Cin)  conv weight, tap-major, BN scale folded (VMEM)
    bias_ref: (Cout, 1)         folded BN/conv bias                     (VMEM)
    o_ref:    (1, Cout, n_out)  dense (stride-1, full-width) output     (VMEM)
    """
    x = x_ref[0]                                   # (Cin, Lflat), loaded once
    cout = o_ref.shape[1]

    acc = jnp.zeros((cout, n_out), dtype=jnp.float32)
    # Conv as a sum of K*K shifted matmuls: contraction over Cin on the MXU,
    # the large flattened-spatial dim stays lane-dense in the accumulator.
    for kh in range(ksize):
        for kw in range(ksize):
            off = kh * wp + kw
            rhs = x[:, off:off + n_out]            # (Cin, n_out) static slice
            acc = acc + jnp.dot(w_ref[kh * ksize + kw], rhs,
                                preferred_element_type=jnp.float32)

    # Folded BatchNorm bias + ReLU epilogue on the VMEM-resident accumulator.
    out = jnp.maximum(acc + bias_ref[...], 0.0)
    o_ref[0] = out.astype(o_ref.dtype)


def conv_block_forward(x_nchw, weight_oihw, conv_bias, gamma, beta,
                       running_mean, running_var, *, stride, eps=1e-5):
    """Matches ConvBlock.forward (eval-mode BatchNorm) on NCHW input."""
    n, cin, h, w = x_nchw.shape
    cout, cin_w, kh_, kw_ = weight_oihw.shape
    assert cin == cin_w and kh_ == kw_
    k = kh_
    pad = k // 2

    hp, wp = h + 2 * pad, w + 2 * pad
    oh1, ow1 = hp - k + 1, wp - k + 1              # dense (stride-1) extents
    oh = (h + 2 * pad - k) // stride + 1           # PyTorch output extents
    ow = (w + 2 * pad - k) // stride + 1

    # Zero pad spatially (one extra bottom row keeps every tap's flat window in
    # bounds), then collapse H,W into one flat axis — a free row-major reshape.
    x_pad = jnp.pad(x_nchw, ((0, 0), (0, 0), (pad, pad + 1), (pad, pad)))
    lflat = (hp + 1) * wp
    x_flat = x_pad.reshape(n, cin, lflat)

    # Fold eval-mode BatchNorm into the conv:
    #   y = s*(W*x + b - mu) + beta  ==  (s*W)*x + (s*(b - mu) + beta)
    # TODO(synk): training-mode BatchNorm (batch statistics over N,H,W) would
    # need a cross-batch reduction pass; this implements eval-mode semantics.
    scale = gamma * lax.rsqrt(running_var + eps)
    w_taps = jnp.transpose(weight_oihw, (2, 3, 0, 1)).reshape(k * k, cout, cin)
    w_taps = (w_taps * scale[None, :, None]).astype(jnp.float32)
    bias2d = (scale * (conv_bias - running_mean) + beta).reshape(cout, 1)
    bias2d = bias2d.astype(jnp.float32)

    n_out = oh1 * wp   # kernel computes all padded-width columns; edges dropped

    kernel = functools.partial(_conv_bn_relu_kernel, ksize=k, wp=wp,
                               n_out=n_out)

    itemsize = jnp.dtype(x_nchw.dtype).itemsize
    flops = 2 * n * n_out * k * k * cin * cout
    bytes_accessed = (x_flat.size + w_taps.size + n * cout * n_out) * itemsize

    out_flat = pl.pallas_call(
        kernel,
        out_shape=jax.ShapeDtypeStruct((n, cout, n_out), x_nchw.dtype),
        grid=(n,),
        in_specs=[
            pl.BlockSpec((1, cin, lflat), lambda b: (b, 0, 0)),
            pl.BlockSpec((k * k, cout, cin), lambda b: (0, 0, 0)),
            pl.BlockSpec((cout, 1), lambda b: (0, 0)),
        ],
        out_specs=pl.BlockSpec((1, cout, n_out), lambda b: (b, 0, 0)),
        compiler_params=pltpu.CompilerParams(
            dimension_semantics=("parallel",)),
        cost_estimate=pl.CostEstimate(
            flops=flops, transcendentals=0, bytes_accessed=bytes_accessed),
    )(x_flat, w_taps, bias2d)

    # (N, Cout, OH1*Wp) -> (N, Cout, OH1, Wp) is a free reshape; one slice drops
    # the wrapped right-edge columns and applies the conv stride.
    # TODO(synk): stride > 1 currently computes the dense (stride-1) output and
    # decimates; a dedicated strided-tap kernel would avoid the extra compute.
    out_dense = out_flat.reshape(n, cout, oh1, wp)
    return out_dense[:, :, ::stride, :ow1:stride]


def _reference_conv_block(x, w, b, gamma, beta, mean, var, *, stride, eps=1e-5):
    k = w.shape[-1]
    pad = k // 2
    y = lax.conv_general_dilated(
        x, w, window_strides=(stride, stride),
        padding=((pad, pad), (pad, pad)),
        dimension_numbers=("NCHW", "OIHW", "NCHW"))
    y = y + b.reshape(1, -1, 1, 1)
    y = (y - mean.reshape(1, -1, 1, 1)) / jnp.sqrt(var.reshape(1, -1, 1, 1) + eps)
    y = y * gamma.reshape(1, -1, 1, 1) + beta.reshape(1, -1, 1, 1)
    return jnp.maximum(y, 0.0)


def _run_case(case_idx, n, cin, h, w, cout, k, stride):
    key = jax.random.fold_in(jax.random.PRNGKey(0), case_idx)
    kx, kw_, kb, kg, kbt, km, kv = jax.random.split(key, 7)

    x = jax.random.normal(kx, (n, cin, h, w), dtype=jnp.float32)
    weight = jax.random.normal(kw_, (cout, cin, k, k), dtype=jnp.float32) * 0.1
    conv_bias = jax.random.normal(kb, (cout,), dtype=jnp.float32) * 0.1
    gamma = 1.0 + 0.1 * jax.random.normal(kg, (cout,), dtype=jnp.float32)
    beta = 0.1 * jax.random.normal(kbt, (cout,), dtype=jnp.float32)
    running_mean = 0.1 * jax.random.normal(km, (cout,), dtype=jnp.float32)
    running_var = jax.random.uniform(kv, (cout,), dtype=jnp.float32,
                                     minval=0.5, maxval=1.5)

    fwd = jax.jit(functools.partial(conv_block_forward, stride=stride))
    out = jax.block_until_ready(
        fwd(x, weight, conv_bias, gamma, beta, running_mean, running_var))

    ref = _reference_conv_block(x, weight, conv_bias, gamma, beta,
                                running_mean, running_var, stride=stride)
    pad = k // 2
    oh = (h + 2 * pad - k) // stride + 1
    ow = (w + 2 * pad - k) // stride + 1
    assert out.shape == (n, cout, oh, ow), (case_idx, out.shape)
    max_err = float(jnp.max(jnp.abs(out - ref)))
    assert jnp.allclose(out, ref, atol=5e-4, rtol=5e-4), (case_idx, max_err)


if __name__ == "__main__":
    # (batch, in_channels, H, W, out_channels, kernel_size, stride)
    _run_case(0, 2, 4, 16, 16, 32, 3, 1)
    _run_case(1, 2, 4, 16, 16, 32, 3, 2)
    _run_case(2, 2, 8, 16, 16, 16, 5, 1)
    print("KERNEL_OK")
</pallas_src>

<mosaic_0001>
module attributes {stable_mosaic.version = 11 : i64} {
  func.func @_conv_bn_relu_kernel(%arg0: i32, %arg1: memref<1x4x342xf32, #tpu.memory_space<vmem>>, %arg2: memref<9x32x4xf32, #tpu.memory_space<vmem>>, %arg3: memref<32x1xf32, #tpu.memory_space<vmem>>, %arg4: memref<1x32x288xf32, #tpu.memory_space<vmem>>) attributes {dimension_semantics = [#tpu.dimension_semantics<parallel>], iteration_bounds = array<i64: 2>, scalar_prefetch = 0 : i64, scratch_operands = 0 : i64, tpu.core_type = #tpu.core_type<tc>, window_params = [{transform_indices = @transform_0, window_bounds = array<i64: 1, 4, 342>}, {pipeline_mode = #tpu.pipeline_mode<synchronous>, transform_indices = @transform_1, window_bounds = array<i64: 9, 32, 4>}, {pipeline_mode = #tpu.pipeline_mode<synchronous>, transform_indices = @transform_2, window_bounds = array<i64: 32, 1>}, {transform_indices = @transform_3, window_bounds = array<i64: 1, 32, 288>}]} {
    %c0 = arith.constant 0 : index
    %c0_0 = arith.constant 0 : index
    %c0_1 = arith.constant 0 : index
    %0 = vector.load %arg1[%c0, %c0_0, %c0_1] : memref<1x4x342xf32, #tpu.memory_space<vmem>>, vector<1x4x342xf32>
    %1 = vector.shape_cast %0 : vector<1x4x342xf32> to vector<4x342xf32>
    %cst = arith.constant 0.000000e+00 : f32
    %2 = vector.broadcast %cst : f32 to vector<32x288xf32>
    %3 = vector.extract_strided_slice %1 {offsets = [0, 0], sizes = [4, 288], strides = [1, 1]} : vector<4x342xf32> to vector<4x288xf32>
    %c0_2 = arith.constant 0 : index
    %c0_3 = arith.constant 0 : index
    %c0_4 = arith.constant 0 : index
    %4 = vector.load %arg2[%c0_2, %c0_3, %c0_4] : memref<9x32x4xf32, #tpu.memory_space<vmem>>, vector<1x32x4xf32>
    %5 = vector.shape_cast %4 : vector<1x32x4xf32> to vector<32x4xf32>
    %cst_5 = arith.constant dense<0.000000e+00> : vector<32x288xf32>
    %6 = tpu.matmul %5, %3, %cst_5 {dimension_numbers = #tpu.dot_dimension_numbers<[1], [0], [0], [1], [0, 0, 1, 1], [], []>} : vector<32x4xf32>, vector<4x288xf32>, vector<32x288xf32> -> vector<32x288xf32>
    %7 = arith.addf %2, %6 : vector<32x288xf32>
    %8 = vector.extract_strided_slice %1 {offsets = [0, 1], sizes = [4, 288], strides = [1, 1]} : vector<4x342xf32> to vector<4x288xf32>
    %c1 = arith.constant 1 : index
    %c0_6 = arith.constant 0 : index
    %c0_7 = arith.constant 0 : index
    %9 = vector.load %arg2[%c1, %c0_6, %c0_7] : memref<9x32x4xf32, #tpu.memory_space<vmem>>, vector<1x32x4xf32>
    %10 = vector.shape_cast %9 : vector<1x32x4xf32> to vector<32x4xf32>
    %cst_8 = arith.constant dense<0.000000e+00> : vector<32x288xf32>
    %11 = tpu.matmul %10, %8, %cst_8 {dimension_numbers = #tpu.dot_dimension_numbers<[1], [0], [0], [1], [0, 0, 1, 1], [], []>} : vector<32x4xf32>, vector<4x288xf32>, vector<32x288xf32> -> vector<32x288xf32>
    %12 = arith.addf %7, %11 : vector<32x288xf32>
    %13 = vector.extract_strided_slice %1 {offsets = [0, 2], sizes = [4, 288], strides = [1, 1]} : vector<4x342xf32> to vector<4x288xf32>
    %c2 = arith.constant 2 : index
    %c0_9 = arith.constant 0 : index
    %c0_10 = arith.constant 0 : index
    %14 = vector.load %arg2[%c2, %c0_9, %c0_10] : memref<9x32x4xf32, #tpu.memory_space<vmem>>, vector<1x32x4xf32>
    %15 = vector.shape_cast %14 : vector<1x32x4xf32> to vector<32x4xf32>
    %cst_11 = arith.constant dense<0.000000e+00> : vector<32x288xf32>
    %16 = tpu.matmul %15, %13, %cst_11 {dimension_numbers = #tpu.dot_dimension_numbers<[1], [0], [0], [1], [0, 0, 1, 1], [], []>} : vector<32x4xf32>, vector<4x288xf32>, vector<32x288xf32> -> vector<32x288xf32>
    %17 = arith.addf %12, %16 : vector<32x288xf32>
    %18 = vector.extract_strided_slice %1 {offsets = [0, 18], sizes = [4, 288], strides = [1, 1]} : vector<4x342xf32> to vector<4x288xf32>
    %c3 = arith.constant 3 : index
    %c0_12 = arith.constant 0 : index
    %c0_13 = arith.constant 0 : index
    %19 = vector.load %arg2[%c3, %c0_12, %c0_13] : memref<9x32x4xf32, #tpu.memory_space<vmem>>, vector<1x32x4xf32>
    %20 = vector.shape_cast %19 : vector<1x32x4xf32> to vector<32x4xf32>
    %cst_14 = arith.constant dense<0.000000e+00> : vector<32x288xf32>
    %21 = tpu.matmul %20, %18, %cst_14 {dimension_numbers = #tpu.dot_dimension_numbers<[1], [0], [0], [1], [0, 0, 1, 1], [], []>} : vector<32x4xf32>, vector<4x288xf32>, vector<32x288xf32> -> vector<32x288xf32>
    %22 = arith.addf %17, %21 : vector<32x288xf32>
    %23 = vector.extract_strided_slice %1 {offsets = [0, 19], sizes = [4, 288], strides = [1, 1]} : vector<4x342xf32> to vector<4x288xf32>
    %c4 = arith.constant 4 : index
    %c0_15 = arith.constant 0 : index
    %c0_16 = arith.constant 0 : index
    %24 = vector.load %arg2[%c4, %c0_15, %c0_16] : memref<9x32x4xf32, #tpu.memory_space<vmem>>, vector<1x32x4xf32>
    %25 = vector.shape_cast %24 : vector<1x32x4xf32> to vector<32x4xf32>
    %cst_17 = arith.constant dense<0.000000e+00> : vector<32x288xf32>
    %26 = tpu.matmul %25, %23, %cst_17 {dimension_numbers = #tpu.dot_dimension_numbers<[1], [0], [0], [1], [0, 0, 1, 1], [], []>} : vector<32x4xf32>, vector<4x288xf32>, vector<32x288xf32> -> vector<32x288xf32>
    %27 = arith.addf %22, %26 : vector<32x288xf32>
    %28 = vector.extract_strided_slice %1 {offsets = [0, 20], sizes = [4, 288], strides = [1, 1]} : vector<4x342xf32> to vector<4x288xf32>
    %c5 = arith.constant 5 : index
    %c0_18 = arith.constant 0 : index
    %c0_19 = arith.constant 0 : index
    %29 = vector.load %arg2[%c5, %c0_18, %c0_19] : memref<9x32x4xf32, #tpu.memory_space<vmem>>, vector<1x32x4xf32>
    %30 = vector.shape_cast %29 : vector<1x32x4xf32> to vector<32x4xf32>
    %cst_20 = arith.constant dense<0.000000e+00> : vector<32x288xf32>
    %31 = tpu.matmul %30, %28, %cst_20 {dimension_numbers = #tpu.dot_dimension_numbers<[1], [0], [0], [1], [0, 0, 1, 1], [], []>} : vector<32x4xf32>, vector<4x288xf32>, vector<32x288xf32> -> vector<32x288xf32>
    %32 = arith.addf %27, %31 : vector<32x288xf32>
    %33 = vector.extract_strided_slice %1 {offsets = [0, 36], sizes = [4, 288], strides = [1, 1]} : vector<4x342xf32> to vector<4x288xf32>
    %c6 = arith.constant 6 : index
    %c0_21 = arith.constant 0 : index
    %c0_22 = arith.constant 0 : index
    %34 = vector.load %arg2[%c6, %c0_21, %c0_22] : memref<9x32x4xf32, #tpu.memory_space<vmem>>, vector<1x32x4xf32>
    %35 = vector.shape_cast %34 : vector<1x32x4xf32> to vector<32x4xf32>
    %cst_23 = arith.constant dense<0.000000e+00> : vector<32x288xf32>
    %36 = tpu.matmul %35, %33, %cst_23 {dimension_numbers = #tpu.dot_dimension_numbers<[1], [0], [0], [1], [0, 0, 1, 1], [], []>} : vector<32x4xf32>, vector<4x288xf32>, vector<32x288xf32> -> vector<32x288xf32>
    %37 = arith.addf %32, %36 : vector<32x288xf32>
    %38 = vector.extract_strided_slice %1 {offsets = [0, 37], sizes = [4, 288], strides = [1, 1]} : vector<4x342xf32> to vector<4x288xf32>
    %c7 = arith.constant 7 : index
    %c0_24 = arith.constant 0 : index
    %c0_25 = arith.constant 0 : index
    %39 = vector.load %arg2[%c7, %c0_24, %c0_25] : memref<9x32x4xf32, #tpu.memory_space<vmem>>, vector<1x32x4xf32>
    %40 = vector.shape_cast %39 : vector<1x32x4xf32> to vector<32x4xf32>
    %cst_26 = arith.constant dense<0.000000e+00> : vector<32x288xf32>
    %41 = tpu.matmul %40, %38, %cst_26 {dimension_numbers = #tpu.dot_dimension_numbers<[1], [0], [0], [1], [0, 0, 1, 1], [], []>} : vector<32x4xf32>, vector<4x288xf32>, vector<32x288xf32> -> vector<32x288xf32>
    %42 = arith.addf %37, %41 : vector<32x288xf32>
    %43 = vector.extract_strided_slice %1 {offsets = [0, 38], sizes = [4, 288], strides = [1, 1]} : vector<4x342xf32> to vector<4x288xf32>
    %c8 = arith.constant 8 : index
    %c0_27 = arith.constant 0 : index
    %c0_28 = arith.constant 0 : index
    %44 = vector.load %arg2[%c8, %c0_27, %c0_28] : memref<9x32x4xf32, #tpu.memory_space<vmem>>, vector<1x32x4xf32>
    %45 = vector.shape_cast %44 : vector<1x32x4xf32> to vector<32x4xf32>
    %cst_29 = arith.constant dense<0.000000e+00> : vector<32x288xf32>
    %46 = tpu.matmul %45, %43, %cst_29 {dimension_numbers = #tpu.dot_dimension_numbers<[1], [0], [0], [1], [0, 0, 1, 1], [], []>} : vector<32x4xf32>, vector<4x288xf32>, vector<32x288xf32> -> vector<32x288xf32>
    %47 = arith.addf %42, %46 : vector<32x288xf32>
    %c0_30 = arith.constant 0 : index
    %c0_31 = arith.constant 0 : index
    %48 = vector.load %arg3[%c0_30, %c0_31] : memref<32x1xf32, #tpu.memory_space<vmem>>, vector<32x1xf32>
    %49 = vector.broadcast %48 : vector<32x1xf32> to vector<32x288xf32>
    %50 = arith.addf %47, %49 : vector<32x288xf32>
    %cst_32 = arith.constant 0.000000e+00 : f32
    %51 = vector.broadcast %cst_32 : f32 to vector<32x288xf32>
    %52 = arith.maximumf %50, %51 : vector<32x288xf32>
    %c0_33 = arith.constant 0 : index
    %c0_34 = arith.constant 0 : index
    %c0_35 = arith.constant 0 : index
    %53 = vector.load %arg4[%c0_33, %c0_34, %c0_35] : memref<1x32x288xf32, #tpu.memory_space<vmem>>, vector<1x32x288xf32>
    %54 = vector.shape_cast %53 : vector<1x32x288xf32> to vector<32x288xf32>
    %55 = vector.shape_cast %52 : vector<32x288xf32> to vector<1x32x288xf32>
    tpu.vector_store %arg4[%c0_33, %c0_34, %c0_35], %55 {strides = array<i32>} : memref<1x32x288xf32, #tpu.memory_space<vmem>>, vector<1x32x288xf32>,
    return
  }
  func.func @transform_0(%arg0: i32) -> (i32, i32, i32) {
    %c0_i32 = arith.constant 0 : i32
    %c0_i32_0 = arith.constant 0 : i32
    %c0_i32_1 = arith.constant 0 : i32
    return %arg0, %c0_i32, %c0_i32_0 : i32, i32, i32
  }
  func.func @transform_1(%arg0: i32) -> (i32, i32, i32) {
    %c0_i32 = arith.constant 0 : i32
    %c0_i32_0 = arith.constant 0 : i32
    %c0_i32_1 = arith.constant 0 : i32
    %c0_i32_2 = arith.constant 0 : i32
    return %c0_i32, %c0_i32_0, %c0_i32_1 : i32, i32, i32
  }
  func.func @transform_2(%arg0: i32) -> (i32, i32) {
    %c0_i32 = arith.constant 0 : i32
    %c0_i32_0 = arith.constant 0 : i32
    %c0_i32_1 = arith.constant 0 : i32
    return %c0_i32, %c0_i32_0 : i32, i32
  }
  func.func @transform_3(%arg0: i32) -> (i32, i32, i32) {
    %c0_i32 = arith.constant 0 : i32
    %c0_i32_0 = arith.constant 0 : i32
    %c0_i32_1 = arith.constant 0 : i32
    return %arg0, %c0_i32, %c0_i32_0 : i32, i32, i32
  }
}

</mosaic_0001>

<llo_original>
// kernel: conv_block_forward.1
$region0: #{conv_block_forward.1}
  #allocation0 [shape = 'u32[]', space=smem, size = 0x4, offset = 0x4, fixed_abs, tag = 'smem constant byte address 0x4 - core index']
  #allocation1 [shape = 'u32[72,128]{1,0:T(1,128)}', space=vmem, size = 0x9000, scoped, tag = 'internal scratch']
  %s0 = inlined_call_operand.vmem [shape: f32[2,4,342], index: 0, kind: input, shape index: {}]
  %s1 = inlined_call_operand.vmem [shape: f32[9,32,4], index: 1, kind: input, shape index: {}]
  %s2 = inlined_call_operand.vmem [shape: f32[32,1], index: 2, kind: input, shape index: {}]
  %s3 = inlined_call_operand.vmem [shape: f32[2,32,288], index: 3, kind: output, shape index: {}]
  %s4 = sld [smem:[#allocation0]]
  $region45: #{conv_block_forward.1} parent=0
    _
  %s6 = ssub.s32 1, %s4
  %s7 = scalar_select 0, %s6, %s4
  loop: start=0, step=1, limit=4
  $region2: #{conv_block_forward.1} parent=0 // loop_pre_header
    _
  $region3: #{conv_block_forward.1} parent=0 // loop_header
    %s9 = sphi 0, %s13
    %p10 = scmp.ge.s32.totalorder %s9, 4
    %s19 = sphi 0, %s21
    %s22 = sphi 0, %s19
    %s23 = sphi 0, %s22
    %s39 = sphi 0, %s23
    %s43 = sphi 0, %s43
    %s45 = sphi 0, %s43
    %s46 = sphi 0, %s45
    %s60 = sphi 0, %s46
    %s64 = sphi 0, %s64
    %s66 = sphi 0, %s64
    %s67 = sphi 0, %s66
    %s81 = sphi 0, %s67
    %s87 = sphi 0, %s89
    %s90 = sphi 0, %s87
    %s91 = sphi 0, %s90
    %s107 = sphi 0, %s91
  $region4: #{conv_block_forward.1} parent=0 // loop_header_branch
    %12 = sbr.rel (%p10) target = $region8
  $region5: #{conv_block_forward.1} parent=0 // loop_body
    %s14 = ssub.s32 %s9, 1
    %s15 = ssub.s32 %s9, 2
    %s16 = sadd.s32 %s9, 1
    %s17 = ssub.s32 %s9, %s16
    %p18 = scmp.eq.s32.totalorder %s17, 0
    %s20 = sadd.s32 %s19, 1
    %s21 = scalar_select %p18, %s19, %s20
    %p24 = pneg %p18
    %p25 = scmp.eq.s32.totalorder %s9, 1
    %p26 = por %p24, %p25
    %p27 = scmp.ne.s32.totalorder %s19, %s22
    %p28 = scmp.eq.s32.totalorder %s9, 0
    %p29 = por %p27, %p28
    %p30 = scmp.ne.s32.totalorder %s19, %s22
    %p31 = scmp.eq.s32.totalorder %s14, 1
    %p32 = por %p30, %p31
    %p33 = scmp.ne.s32.totalorder %s22, %s23
    %p34 = scmp.eq.s32.totalorder %s14, 0
    %p35 = por %p33, %p34
    %p36 = scmp.ne.s32.totalorder %s22, %s23
    %p37 = scmp.eq.s32.totalorder %s15, 1
    %p38 = por %p36, %p37
    %p40 = scmp.ne.s32.totalorder %s23, %s39
    %p41 = scmp.eq.s32.totalorder %s15, 0
    %p42 = por %p40, %p41
    %s44 = sadd.s32 %s43, 1
    %p47 = scmp.eq.s32.totalorder %s9, 1
    %p48 = scmp.ne.s32.totalorder %s43, %s45
    %p49 = scmp.eq.s32.totalorder %s9, 0
    %p50 = por %p48, %p49
    %p51 = scmp.ne.s32.totalorder %s43, %s45
    %p52 = scmp.eq.s32.totalorder %s14, 1
    %p53 = por %p51, %p52
    %p54 = scmp.ne.s32.totalorder %s45, %s46
    %p55 = scmp.eq.s32.totalorder %s14, 0
    %p56 = por %p54, %p55
    %p57 = scmp.ne.s32.totalorder %s45, %s46
    %p58 = scmp.eq.s32.totalorder %s15, 1
    %p59 = por %p57, %p58
    %p61 = scmp.ne.s32.totalorder %s46, %s60
    %p62 = scmp.eq.s32.totalorder %s15, 0
    %p63 = por %p61, %p62
    %s65 = sadd.s32 %s64, 1
    %p68 = scmp.eq.s32.totalorder %s9, 1
    %p69 = scmp.ne.s32.totalorder %s64, %s66
    %p70 = scmp.eq.s32.totalorder %s9, 0
    %p71 = por %p69, %p70
    %p72 = scmp.ne.s32.totalorder %s64, %s66
    %p73 = scmp.eq.s32.totalorder %s14, 1
    %p74 = por %p72, %p73
    %p75 = scmp.ne.s32.totalorder %s66, %s67
    %p76 = scmp.eq.s32.totalorder %s14, 0
    %p77 = por %p75, %p76
    %p78 = scmp.ne.s32.totalorder %s66, %s67
    %p79 = scmp.eq.s32.totalorder %s15, 1
    %p80 = por %p78, %p79
    %p82 = scmp.ne.s32.totalorder %s67, %s81
    %p83 = scmp.eq.s32.totalorder %s15, 0
    %p84 = por %p82, %p83
    %s85 = ssub.s32 %s9, %s16
    %p86 = scmp.eq.s32.totalorder %s85, 0
    %s88 = sadd.s32 %s87, 1
    %s89 = scalar_select %p86, %s87, %s88
    %p92 = pneg %p86
    %p93 = scmp.eq.s32.totalorder %s9, 1
    %p94 = por %p92, %p93
    %p95 = scmp.ne.s32.totalorder %s87, %s90
    %p96 = scmp.eq.s32.totalorder %s9, 0
    %p97 = por %p95, %p96
    %p98 = scmp.ne.s32.totalorder %s87, %s90
    %p99 = scmp.eq.s32.totalorder %s14, 1
    %p100 = por %p98, %p99
    %p101 = scmp.ne.s32.totalorder %s90, %s91
    %p102 = scmp.eq.s32.totalorder %s14, 0
    %p103 = por %p101, %p102
    %p104 = scmp.ne.s32.totalorder %s90, %s91
    %p105 = scmp.eq.s32.totalorder %s15, 1
    %p106 = por %p104, %p105
    %p108 = scmp.ne.s32.totalorder %s91, %s107
    %p109 = scmp.eq.s32.totalorder %s15, 0
    %p110 = por %p108, %p109
    %p111 = scmp.le.s32.totalorder 1, %s9
    %p112 = scmp.lt.s32.totalorder %s9, 3
    %p113 = pnand %p111, %p112
    %p114 = pneg %p113
    // Predicated region
    $region9: #{conv_block_forward.1} parent=5 // pred_check
      _
    $region10: #{conv_block_forward.1} parent=5 // pred_check_branch
      %116 = sbr.rel (%p113) target = $region12
    $region11: #{conv_block_forward.1} parent=5 // pred_region
      %s117 = ssub.s32 %s9, 1
      // Predicated region
      $region13: #{conv_block_forward.1} parent=11 // pred_check
        %p118 = pneg %p56
      $region14: #{conv_block_forward.1} parent=11 // pred_check_branch
        %120 = sbr.rel (%p118) target = $region16
      $region15: #{conv_block_forward.1} parent=11 // pred_region
        _
      $region16: #{conv_block_forward.1} parent=11 // pred_fallthru
        _
      // Predicated region
      $region17: #{conv_block_forward.1} parent=11 // pred_check
        %p121 = pneg %p77
      $region18: #{conv_block_forward.1} parent=11 // pred_check_branch
        %123 = sbr.rel (%p121) target = $region20
      $region19: #{conv_block_forward.1} parent=11 // pred_region
        _
      $region20: #{conv_block_forward.1} parent=11 // pred_fallthru
        _
    $region12: #{conv_block_forward.1} parent=5 // pred_fallthru
      _
    %p124 = scmp.lt.s32.totalorder %s9, 2
    // Predicated region
    $region21: #{conv_block_forward.1} parent=5 // pred_check
      %p125 = pneg %p124
    $region22: #{conv_block_forward.1} parent=5 // pred_check_branch
      %127 = sbr.rel (%p125) target = $region24
    $region23: #{conv_block_forward.1} parent=5 // pred_region
      // Predicated region
      $region25: #{conv_block_forward.1} parent=23 // pred_check
        %p128 = pneg %p29
      $region26: #{conv_block_forward.1} parent=23 // pred_check_branch
        %130 = sbr.rel (%p128) target = $region28
      $region27: #{conv_block_forward.1} parent=23 // pred_region
        %p131 = scmp.lt.s32.totalorder %s9, 1
        %s132 = scalar_select %p131, %s9, 1
        %s133 = smul.addr %s132, 3
        %s134 = smul.addr %s133, 4
        %s135 = scalar_lea.vmem %s0, %s134
      $region28: #{conv_block_forward.1} parent=23 // pred_fallthru
        _
    $region24: #{conv_block_forward.1} parent=5 // pred_fallthru
      _
    %p136 = scmp.le.s32.totalorder 1, %s9
    %p137 = scmp.lt.s32.totalorder %s9, 3
    %p138 = pnand %p136, %p137
    %p139 = pneg %p138
    // Predicated region
    $region29: #{conv_block_forward.1} parent=5 // pred_check
      _
    $region30: #{conv_block_forward.1} parent=5 // pred_check_branch
      %141 = sbr.rel (%p138) target = $region32
    $region31: #{conv_block_forward.1} parent=5 // pred_region
      %s142 = ssub.s32 %s9, 1
      %p143 = scmp.lt.s32.totalorder %s14, 1
      %s144 = scalar_select %p143, %s14, 1
      %s145 = smul.addr %s144, 3
      %s146 = smul.addr %s145, 4
      %s147 = scalar_lea.vmem %s0, %s146
      %p148 = pneg %p35
      %p149 = pneg %p32
      %p150 = pneg %p56
      %p151 = pneg %p53
      %p152 = pneg %p77
      %p153 = pneg %p74
      %p154 = pneg %p103
      %p155 = pneg %p100
      %p156 = scmp.lt.s32.totalorder %s14, 1
      %s157 = scalar_select %p156, %s14, 1
      %s158 = smul.addr %s157, 12
      %s159 = smul.addr %s158, 8
      %s160 = scalar_lea.vmem %s3, %s159
      %p161 = scmp.lt.s32.totalorder %s14, 1
      %s162 = scalar_select %p161, %s14, 1
      %s163 = smul.addr %s162, 3
      %s164 = smul.addr %s163, 4
      %s165 = scalar_lea.vmem %s0, %s164
      %p166 = scmp.lt.s32.totalorder %s14, 1
      %s167 = scalar_select %p166, %s14, 1
      %s168 = smul.addr %s167, 12
      %s169 = smul.addr %s168, 8
      %s170 = scalar_lea.vmem %s3, %s169
      %v171 = vld [vmem:[%s165] sm:$0xff]
      %v172 = vld [vmem:[%s165 + $0x8] sm:$0xf]
      %v173 = vld [vmem:[%s1] sm:$0xff]
      %v174 = vld [vmem:[%s1 + $0x8] sm:$0xff]
      %v175 = vld [vmem:[%s1 + $0x10] sm:$0xff]
      %v176 = vld [vmem:[%s1 + $0x18] sm:$0xff]
      %s177 = scalar_lea.vmem %s1, 32
      %v178 = vld [vmem:[%s177] sm:$0xff]
      %v179 = vld [vmem:[%s177 + $0x8] sm:$0xff]
      %v180 = vld [vmem:[%s177 + $0x10] sm:$0xff]
      %v181 = vld [vmem:[%s177 + $0x18] sm:$0xff]
      %184 = vst [vmem:[#allocation1] ss:$2 sm:$0xff] %v171
      %s185 = scalar_lea.vmem [#allocation1], 16
      %186 = vst [vmem:[%s185] ss:$2 sm:$0xff] %v172
      %v187 = vld.sshfl [vmem:[#allocation1] sm:$0xff pattern:$0x75316420]
      %v188 = vld.sshfl [vmem:[#allocation1 + $0x8] sm:$0xff pattern:$0x75316420]
      %v189 = vld.sshfl [vmem:[#allocation1 + $0x10] sm:$0xff pattern:$0x75316420]
      %190 = vrot.lane.b32.xlu0 %v187, 127
      %v191 = vpop.permute.xlu0 %190
      %192 = vrot.lane.b32.xlu0 %v188, 127
      %v193 = vpop.permute.xlu0 %192
      %194 = vrot.lane.b32.xlu0 %v189, 127
      %v195 = vpop.permute.xlu0 %194
      %vm196 = vcmask 1039360
      %v197 = vsel %vm196, %v191, %v193
      %v198 = vsel %vm196, %v193, %v195
      %vm199 = vcmask 31744
      %v201 = vsel %vm199, %v178, 0
      %v204 = vsel %vm199, %v179, 0
      %v207 = vsel %vm199, %v180, 0
      %v210 = vsel %vm199, %v181, 0
      %vm212 = vcmask 1043456
      %v213 = vsel %vm212, %v197, 0
      %v215 = vsel %vm212, %v198, 0
      %v217 = vsel %vm212, %v195, 0
      %219 = vmatpush.msra.mxu0 0.0
      %220 = vmatpush.msra.mxu0 0.0
      %221 = vmatpush.msra.mxu0 0.0
      %222 = vmatpush.msra.mxu0 0.0
      %223 = vmatpush.msra.mxu0 0.0
      %224 = vmatpush.msra.mxu0 0.0
      %225 = vmatpush.msra.mxu0 0.0
      %226 = vmatpush.msra.mxu0 0.0
      %227 = vmatpush.msra.mxu0 0.0
      %228 = vmatpush.msra.mxu0 0.0
      %229 = vmatpush.msra.mxu0 0.0
      %230 = vmatpush.msra.mxu0 0.0
      %231 = vmatpush.msra.mxu0 0.0
      %232 = vmatpush.msra.mxu0 0.0
      %233 = vmatpush.msra.mxu0 0.0
      %234 = vmatpush.msra.mxu0 %v213
      %235 = vmatmul.f32.gmra.mxu0 %v201
      %v236 = vpop.f32.mrf.mxu0
      %v237 = vadd.f32 0.0, %v236
      %238 = vmatmul.f32.gmra.mxu0 %v204
      %v239 = vpop.f32.mrf.mxu0
      %v240 = vadd.f32 0.0, %v239
      %241 = vmatmul.f32.gmra.mxu0 %v207
      %v242 = vpop.f32.mrf.mxu0
      %v243 = vadd.f32 0.0, %v242
      %244 = vmatmul.f32.gmra.mxu0 %v210
      %v245 = vpop.f32.mrf.mxu0
      %v246 = vadd.f32 0.0, %v245
      %247 = vdwg.mxu0
      %248 = vmatpush.msra.mxu0 0.0
      %249 = vmatpush.msra.mxu0 0.0
      %250 = vmatpush.msra.mxu0 0.0
      %251 = vmatpush.msra.mxu0 0.0
      %252 = vmatpush.msra.mxu0 0.0
      %253 = vmatpush.msra.mxu0 0.0
      %254 = vmatpush.msra.mxu0 0.0
      %255 = vmatpush.msra.mxu0 0.0
      %256 = vmatpush.msra.mxu0 0.0
      %257 = vmatpush.msra.mxu0 0.0
      %258 = vmatpush.msra.mxu0 0.0
      %259 = vmatpush.msra.mxu0 0.0
      %260 = vmatpush.msra.mxu0 0.0
      %261 = vmatpush.msra.mxu0 0.0
      %262 = vmatpush.msra.mxu0 0.0
      %263 = vmatpush.msra.mxu0 %v215
      %264 = vmatmul.f32.gmra.mxu0 %v201
      %v265 = vpop.f32.mrf.mxu0
      %v266 = vadd.f32 0.0, %v265
      %267 = vmatmul.f32.gmra.mxu0 %v204
      %v268 = vpop.f32.mrf.mxu0
      %v269 = vadd.f32 0.0, %v268
      %270 = vmatmul.f32.gmra.mxu0 %v207
      %v271 = vpop.f32.mrf.mxu0
      %v272 = vadd.f32 0.0, %v271
      %273 = vmatmul.f32.gmra.mxu0 %v210
      %v274 = vpop.f32.mrf.mxu0
      %v275 = vadd.f32 0.0, %v274
      %276 = vdwg.mxu0
      %277 = vmatpush.msra.mxu0 0.0
      %278 = vmatpush.msra.mxu0 0.0
      %279 = vmatpush.msra.mxu0 0.0
      %280 = vmatpush.msra.mxu0 0.0
      %281 = vmatpush.msra.mxu0 0.0
      %282 = vmatpush.msra.mxu0 0.0
      %283 = vmatpush.msra.mxu0 0.0
      %284 = vmatpush.msra.mxu0 0.0
      %285 = vmatpush.msra.mxu0 0.0
      %286 = vmatpush.msra.mxu0 0.0
      %287 = vmatpush.msra.mxu0 0.0
      %288 = vmatpush.msra.mxu0 0.0
      %289 = vmatpush.msra.mxu0 0.0
      %290 = vmatpush.msra.mxu0 0.0
      %291 = vmatpush.msra.mxu0 0.0
      %292 = vmatpush.msra.mxu0 %v217
      %293 = vmatmul.f32.gmra.mxu0 %v201
      %v294 = vpop.f32.mrf.mxu0
      %v295 = vadd.f32 0.0, %v294
      %296 = vmatmul.f32.gmra.mxu0 %v204
      %v297 = vpop.f32.mrf.mxu0
      %v298 = vadd.f32 0.0, %v297
      %299 = vmatmul.f32.gmra.mxu0 %v207
      %v300 = vpop.f32.mrf.mxu0
      %v301 = vadd.f32 0.0, %v300
      %302 = vmatmul.f32.gmra.mxu0 %v210
      %v303 = vpop.f32.mrf.mxu0
      %v304 = vadd.f32 0.0, %v303
      %305 = vdwg.mxu0
      %306 = vst [vmem:[#allocation1] ss:$2 sm:$0xff] %v171
      %s307 = scalar_lea.vmem [#allocation1], 16
      %308 = vst [vmem:[%s307] ss:$2 sm:$0xff] %v172
      %v309 = vld.sshfl [vmem:[#allocation1] sm:$0xff pattern:$0x75316420]
      %v310 = vld.sshfl [vmem:[#allocation1 + $0x8] sm:$0xff pattern:$0x75316420]
      %v311 = vld.sshfl [vmem:[#allocation1 + $0x10] sm:$0xff pattern:$0x75316420]
      %v313 = vsel %vm199, %v173, 0
      %v316 = vsel %vm199, %v174, 0
      %v319 = vsel %vm199, %v175, 0
      %v322 = vsel %vm199, %v176, 0
      %v324 = vsel %vm212, %v309, 0
      %v326 = vsel %vm212, %v310, 0
      %v328 = vsel %vm212, %v311, 0
      %330 = vmatpush.msra.mxu0 0.0
      %331 = vmatpush.msra.mxu0 0.0
      %332 = vmatpush.msra.mxu0 0.0
      %333 = vmatpush.msra.mxu0 0.0
      %334 = vmatpush.msra.mxu0 0.0
      %335 = vmatpush.msra.mxu0 0.0
      %336 = vmatpush.msra.mxu0 0.0
      %337 = vmatpush.msra.mxu0 0.0
      %338 = vmatpush.msra.mxu0 0.0
      %339 = vmatpush.msra.mxu0 0.0
      %340 = vmatpush.msra.mxu0 0.0
      %341 = vmatpush.msra.mxu0 0.0
      %342 = vmatpush.msra.mxu0 0.0
      %343 = vmatpush.msra.mxu0 0.0
      %344 = vmatpush.msra.mxu0 0.0
      %345 = vmatpush.msra.mxu0 %v324
      %346 = vmatmul.f32.gmra.mxu0 %v313
      %v347 = vpop.f32.mrf.mxu0
      %v348 = vadd.f32 %v237, %v347
      %349 = vmatmul.f32.gmra.mxu0 %v316
      %v350 = vpop.f32.mrf.mxu0
      %v351 = vadd.f32 %v240, %v350
      %352 = vmatmul.f32.gmra.mxu0 %v319
      %v353 = vpop.f32.mrf.mxu0
      %v354 = vadd.f32 %v243, %v353
      %355 = vmatmul.f32.gmra.mxu0 %v322
      %v356 = vpop.f32.mrf.mxu0
      %v357 = vadd.f32 %v246, %v356
      %358 = vdwg.mxu0
      %359 = vmatpush.msra.mxu0 0.0
      %360 = vmatpush.msra.mxu0 0.0
      %361 = vmatpush.msra.mxu0 0.0
      %362 = vmatpush.msra.mxu0 0.0
      %363 = vmatpush.msra.mxu0 0.0
      %364 = vmatpush.msra.mxu0 0.0
      %365 = vmatpush.msra.mxu0 0.0
      %366 = vmatpush.msra.mxu0 0.0
      %367 = vmatpush.msra.mxu0 0.0
      %368 = vmatpush.msra.mxu0 0.0
      %369 = vmatpush.msra.mxu0 0.0
      %370 = vmatpush.msra.mxu0 0.0
      %371 = vmatpush.msra.mxu0 0.0
      %372 = vmatpush.msra.mxu0 0.0
      %373 = vmatpush.msra.mxu0 0.0
      %374 = vmatpush.msra.mxu0 %v326
      %375 = vmatmul.f32.gmra.mxu0 %v313
      %v376 = vpop.f32.mrf.mxu0
      %v377 = vadd.f32 %v266, %v376
      %378 = vmatmul.f32.gmra.mxu0 %v316
      %v379 = vpop.f32.mrf.mxu0
      %v380 = vadd.f32 %v269, %v379
      %381 = vmatmul.f32.gmra.mxu0 %v319
      %v382 = vpop.f32.mrf.mxu0
      %v383 = vadd.f32 %v272, %v382
      %384 = vmatmul.f32.gmra.mxu0 %v322
      %v385 = vpop.f32.mrf.mxu0
      %v386 = vadd.f32 %v275, %v385
      %387 = vdwg.mxu0
      %388 = vmatpush.msra.mxu0 0.0
      %389 = vmatpush.msra.mxu0 0.0
      %390 = vmatpush.msra.mxu0 0.0
      %391 = vmatpush.msra.mxu0 0.0
      %392 = vmatpush.msra.mxu0 0.0
      %393 = vmatpush.msra.mxu0 0.0
      %394 = vmatpush.msra.mxu0 0.0
      %395 = vmatpush.msra.mxu0 0.0
      %396 = vmatpush.msra.mxu0 0.0
      %397 = vmatpush.msra.mxu0 0.0
      %398 = vmatpush.msra.mxu0 0.0
      %399 = vmatpush.msra.mxu0 0.0
      %400 = vmatpush.msra.mxu0 0.0
      %401 = vmatpush.msra.mxu0 0.0
      %402 = vmatpush.msra.mxu0 0.0
      %403 = vmatpush.msra.mxu0 %v328
      %404 = vmatmul.f32.gmra.mxu0 %v313
      %v405 = vpop.f32.mrf.mxu0
      %v406 = vadd.f32 %v295, %v405
      %407 = vmatmul.f32.gmra.mxu0 %v316
      %v408 = vpop.f32.mrf.mxu0
      %v409 = vadd.f32 %v298, %v408
      %410 = vmatmul.f32.gmra.mxu0 %v319
      %v411 = vpop.f32.mrf.mxu0
      %v412 = vadd.f32 %v301, %v411
      %413 = vmatmul.f32.gmra.mxu0 %v322
      %v414 = vpop.f32.mrf.mxu0
      %v415 = vadd.f32 %v304, %v414
      %416 = vdwg.mxu0
      %s417 = scalar_lea.vmem %s1, 64
      %v418 = vld [vmem:[%s417] sm:$0xff]
      %v419 = vld [vmem:[%s417 + $0x8] sm:$0xff]
      %v420 = vld [vmem:[%s417 + $0x10] sm:$0xff]
      %v421 = vld [vmem:[%s417 + $0x18] sm:$0xff]
      %422 = vst [vmem:[#allocation1] ss:$2 sm:$0xff] %v171
      %s423 = scalar_lea.vmem [#allocation1], 16
      %424 = vst [vmem:[%s423] ss:$2 sm:$0xff] %v172
      %v425 = vld.sshfl [vmem:[#allocation1] sm:$0xff pattern:$0x75316420]
      %v426 = vld.sshfl [vmem:[#allocation1 + $0x8] sm:$0xff pattern:$0x75316420]
      %v427 = vld.sshfl [vmem:[#allocation1 + $0x10] sm:$0xff pattern:$0x75316420]
      %428 = vrot.lane.b32.xlu0 %v425, 126
      %v429 = vpop.permute.xlu0 %428
      %430 = vrot.lane.b32.xlu0 %v426, 126
      %v431 = vpop.permute.xlu0 %430
      %432 = vrot.lane.b32.xlu0 %v427, 126
      %v433 = vpop.permute.xlu0 %432
      %vm434 = vcmask 1031168
      %v435 = vsel %vm434, %v429, %v431
      %v436 = vsel %vm434, %v431, %v433
      %v438 = vsel %vm199, %v418, 0
      %v441 = vsel %vm199, %v419, 0
      %v444 = vsel %vm199, %v420, 0
      %v447 = vsel %vm199, %v421, 0
      %v449 = vsel %vm212, %v435, 0
      %v451 = vsel %vm212, %v436, 0
      %v453 = vsel %vm212, %v433, 0
      %455 = vmatpush.msra.mxu0 0.0
      %456 = vmatpush.msra.mxu0 0.0
      %457 = vmatpush.msra.mxu0 0.0
      %458 = vmatpush.msra.mxu0 0.0
      %459 = vmatpush.msra.mxu0 0.0
      %460 = vmatpush.msra.mxu0 0.0
      %461 = vmatpush.msra.mxu0 0.0
      %462 = vmatpush.msra.mxu0 0.0
      %463 = vmatpush.msra.mxu0 0.0
      %464 = vmatpush.msra.mxu0 0.0
      %465 = vmatpush.msra.mxu0 0.0
      %466 = vmatpush.msra.mxu0 0.0
      %467 = vmatpush.msra.mxu0 0.0
      %468 = vmatpush.msra.mxu0 0.0
      %469 = vmatpush.msra.mxu0 0.0
      %470 = vmatpush.msra.mxu0 %v449
      %471 = vmatmul.f32.gmra.mxu0 %v438
      %v472 = vpop.f32.mrf.mxu0
      %v473 = vadd.f32 0.0, %v472
      %474 = vmatmul.f32.gmra.mxu0 %v441
      %v475 = vpop.f32.mrf.mxu0
      %v476 = vadd.f32 0.0, %v475
      %477 = vmatmul.f32.gmra.mxu0 %v444
      %v478 = vpop.f32.mrf.mxu0
      %v479 = vadd.f32 0.0, %v478
      %480 = vmatmul.f32.gmra.mxu0 %v447
      %v481 = vpop.f32.mrf.mxu0
      %v482 = vadd.f32 0.0, %v481
      %483 = vdwg.mxu0
      %484 = vmatpush.msra.mxu0 0.0
      %485 = vmatpush.msra.mxu0 0.0
      %486 = vmatpush.msra.mxu0 0.0
      %487 = vmatpush.msra.mxu0 0.0
      %488 = vmatpush.msra.mxu0 0.0
      %489 = vmatpush.msra.mxu0 0.0
      %490 = vmatpush.msra.mxu0 0.0
      %491 = vmatpush.msra.mxu0 0.0
      %492 = vmatpush.msra.mxu0 0.0
      %493 = vmatpush.msra.mxu0 0.0
      %494 = vmatpush.msra.mxu0 0.0
      %495 = vmatpush.msra.mxu0 0.0
      %496 = vmatpush.msra.mxu0 0.0
      %497 = vmatpush.msra.mxu0 0.0
      %498 = vmatpush.msra.mxu0 0.0
      %499 = vmatpush.msra.mxu0 %v451
      %500 = vmatmul.f32.gmra.mxu0 %v438
      %v501 = vpop.f32.mrf.mxu0
      %v502 = vadd.f32 0.0, %v501
      %503 = vmatmul.f32.gmra.mxu0 %v441
      %v504 = vpop.f32.mrf.mxu0
      %v505 = vadd.f32 0.0, %v504
      %506 = vmatmul.f32.gmra.mxu0 %v444
      %v507 = vpop.f32.mrf.mxu0
      %v508 = vadd.f32 0.0, %v507
      %509 = vmatmul.f32.gmra.mxu0 %v447
      %v510 = vpop.f32.mrf.mxu0
      %v511 = vadd.f32 0.0, %v510
      %512 = vdwg.mxu0
      %513 = vmatpush.msra.mxu0 0.0
      %514 = vmatpush.msra.mxu0 0.0
      %515 = vmatpush.msra.mxu0 0.0
      %516 = vmatpush.msra.mxu0 0.0
      %517 = vmatpush.msra.mxu0 0.0
      %518 = vmatpush.msra.mxu0 0.0
      %519 = vmatpush.msra.mxu0 0.0
      %520 = vmatpush.msra.mxu0 0.0
      %521 = vmatpush.msra.mxu0 0.0
      %522 = vmatpush.msra.mxu0 0.0
      %523 = vmatpush.msra.mxu0 0.0
      %524 = vmatpush.msra.mxu0 0.0
      %525 = vmatpush.msra.mxu0 0.0
      %526 = vmatpush.msra.mxu0 0.0
      %527 = vmatpush.msra.mxu0 0.0
      %528 = vmatpush.msra.mxu0 %v453
      %529 = vmatmul.f32.gmra.mxu0 %v438
      %v530 = vpop.f32.mrf.mxu0
      %v531 = vadd.f32 0.0, %v530
      %532 = vmatmul.f32.gmra.mxu0 %v441
      %v533 = vpop.f32.mrf.mxu0
      %v534 = vadd.f32 0.0, %v533
      %535 = vmatmul.f32.gmra.mxu0 %v444
      %v536 = vpop.f32.mrf.mxu0
      %v537 = vadd.f32 0.0, %v536
      %538 = vmatmul.f32.gmra.mxu0 %v447
      %v539 = vpop.f32.mrf.mxu0
      %v540 = vadd.f32 0.0, %v539
      %541 = vdwg.mxu0
      %v542 = vadd.f32 %v348, %v473
      %v543 = vadd.f32 %v377, %v502
      %v544 = vadd.f32 %v406, %v531
      %v545 = vadd.f32 %v351, %v476
      %v546 = vadd.f32 %v380, %v505
      %v547 = vadd.f32 %v409, %v534
      %v548 = vadd.f32 %v354, %v479
      %v549 = vadd.f32 %v383, %v508
      %v550 = vadd.f32 %v412, %v537
      %v551 = vadd.f32 %v357, %v482
      %v552 = vadd.f32 %v386, %v511
      %v553 = vadd.f32 %v415, %v540
      %s554 = scalar_lea.vmem %s1, 96
      %v555 = vld [vmem:[%s554] sm:$0xff]
      %v556 = vld [vmem:[%s554 + $0x8] sm:$0xff]
      %v557 = vld [vmem:[%s554 + $0x10] sm:$0xff]
      %v558 = vld [vmem:[%s554 + $0x18] sm:$0xff]
      %559 = vst [vmem:[#allocation1] ss:$2 sm:$0xff] %v171
      %s560 = scalar_lea.vmem [#allocation1], 16
      %561 = vst [vmem:[%s560] ss:$2 sm:$0xff] %v172
      %v562 = vld.sshfl [vmem:[#allocation1] sm:$0xff pattern:$0x75316420]
      %v563 = vld.sshfl [vmem:[#allocation1 + $0x8] sm:$0xff pattern:$0x75316420]
      %v564 = vld.sshfl [vmem:[#allocation1 + $0x10] sm:$0xff pattern:$0x75316420]
      %565 = vrot.lane.b32.xlu0 %v562, 110
      %v566 = vpop.permute.xlu0 %565
      %567 = vrot.lane.b32.xlu0 %v563, 110
      %v568 = vpop.permute.xlu0 %567
      %569 = vrot.lane.b32.xlu0 %v564, 110
      %v570 = vpop.permute.xlu0 %569
      %vm571 = vcmask 900096
      %v572 = vsel %vm571, %v566, %v568
      %v573 = vsel %vm571, %v568, %v570
      %v575 = vsel %vm199, %v555, 0
      %v578 = vsel %vm199, %v556, 0
      %v581 = vsel %vm199, %v557, 0
      %v584 = vsel %vm199, %v558, 0
      %v586 = vsel %vm212, %v572, 0
      %v588 = vsel %vm212, %v573, 0
      %v590 = vsel %vm212, %v570, 0
      %592 = vmatpush.msra.mxu0 0.0
      %593 = vmatpush.msra.mxu0 0.0
      %594 = vmatpush.msra.mxu0 0.0
      %595 = vmatpush.msra.mxu0 0.0
      %596 = vmatpush.msra.mxu0 0.0
      %597 = vmatpush.msra.mxu0 0.0
      %598 = vmatpush.msra.mxu0 0.0
      %599 = vmatpush.msra.mxu0 0.0
      %600 = vmatpush.msra.mxu0 0.0
      %601 = vmatpush.msra.mxu0 0.0
      %602 = vmatpush.msra.mxu0 0.0
      %603 = vmatpush.msra.mxu0 0.0
      %604 = vmatpush.msra.mxu0 0.0
      %605 = vmatpush.msra.mxu0 0.0
      %606 = vmatpush.msra.mxu0 0.0
      %607 = vmatpush.msra.mxu0 %v586
      %608 = vmatmul.f32.gmra.mxu0 %v575
      %v609 = vpop.f32.mrf.mxu0
      %v610 = vadd.f32 0.0, %v609
      %611 = vmatmul.f32.gmra.mxu0 %v578
      %v612 = vpop.f32.mrf.mxu0
      %v613 = vadd.f32 0.0, %v612
      %614 = vmatmul.f32.gmra.mxu0 %v581
      %v615 = vpop.f32.mrf.mxu0
      %v616 = vadd.f32 0.0, %v615
      %617 = vmatmul.f32.gmra.mxu0 %v584
      %v618 = vpop.f32.mrf.mxu0
      %v619 = vadd.f32 0.0, %v618
      %620 = vdwg.mxu0
      %621 = vmatpush.msra.mxu0 0.0
      %622 = vmatpush.msra.mxu0 0.0
      %623 = vmatpush.msra.mxu0 0.0
      %624 = vmatpush.msra.mxu0 0.0
      %625 = vmatpush.msra.mxu0 0.0
      %626 = vmatpush.msra.mxu0 0.0
      %627 = vmatpush.msra.mxu0 0.0
      %628 = vmatpush.msra.mxu0 0.0
      %629 = vmatpush.msra.mxu0 0.0
      %630 = vmatpush.msra.mxu0 0.0
      %631 = vmatpush.msra.mxu0 0.0
      %632 = vmatpush.msra.mxu0 0.0
      %633 = vmatpush.msra.mxu0 0.0
      %634 = vmatpush.msra.mxu0 0.0
      %635 = vmatpush.msra.mxu0 0.0
      %636 = vmatpush.msra.mxu0 %v588
      %637 = vmatmul.f32.gmra.mxu0 %v575
      %v638 = vpop.f32.mrf.mxu0
      %v639 = vadd.f32 0.0, %v638
      %640 = vmatmul.f32.gmra.mxu0 %v578
      %v641 = vpop.f32.mrf.mxu0
      %v642 = vadd.f32 0.0, %v641
      %643 = vmatmul.f32.gmra.mxu0 %v581
      %v644 = vpop.f32.mrf.mxu0
      %v645 = vadd.f32 0.0, %v644
      %646 = vmatmul.f32.gmra.mxu0 %v584
      %v647 = vpop.f32.mrf.mxu0
      %v648 = vadd.f32 0.0, %v647
      %649 = vdwg.mxu0
      %650 = vmatpush.msra.mxu0 0.0
      %651 = vmatpush.msra.mxu0 0.0
      %652 = vmatpush.msra.mxu0 0.0
      %653 = vmatpush.msra.mxu0 0.0
      %654 = vmatpush.msra.mxu0 0.0
      %655 = vmatpush.msra.mxu0 0.0
      %656 = vmatpush.msra.mxu0 0.0
      %657 = vmatpush.msra.mxu0 0.0
      %658 = vmatpush.msra.mxu0 0.0
      %659 = vmatpush.msra.mxu0 0.0
      %660 = vmatpush.msra.mxu0 0.0
      %661 = vmatpush.msra.mxu0 0.0
      %662 = vmatpush.msra.mxu0 0.0
      %663 = vmatpush.msra.mxu0 0.0
      %664 = vmatpush.msra.mxu0 0.0
      %665 = vmatpush.msra.mxu0 %v590
      %666 = vmatmul.f32.gmra.mxu0 %v575
      %v667 = vpop.f32.mrf.mxu0
      %v668 = vadd.f32 0.0, %v667
      %669 = vmatmul.f32.gmra.mxu0 %v578
      %v670 = vpop.f32.mrf.mxu0
      %v671 = vadd.f32 0.0, %v670
      %672 = vmatmul.f32.gmra.mxu0 %v581
      %v673 = vpop.f32.mrf.mxu0
      %v674 = vadd.f32 0.0, %v673
      %675 = vmatmul.f32.gmra.mxu0 %v584
      %v676 = vpop.f32.mrf.mxu0
      %v677 = vadd.f32 0.0, %v676
      %678 = vdwg.mxu0
      %v679 = vadd.f32 %v542, %v610
      %v680 = vadd.f32 %v543, %v639
      %v681 = vadd.f32 %v544, %v668
      %v682 = vadd.f32 %v545, %v613
      %v683 = vadd.f32 %v546, %v642
      %v684 = vadd.f32 %v547, %v671
      %v685 = vadd.f32 %v548, %v616
      %v686 = vadd.f32 %v549, %v645
      %v687 = vadd.f32 %v550, %v674
      %v688 = vadd.f32 %v551, %v619
      %v689 = vadd.f32 %v552, %v648
      %v690 = vadd.f32 %v553, %v677
      %s691 = scalar_lea.vmem %s1, 128
      %v692 = vld [vmem:[%s691] sm:$0xff]
      %v693 = vld [vmem:[%s691 + $0x8] sm:$0xff]
      %v694 = vld [vmem:[%s691 + $0x10] sm:$0xff]
      %v695 = vld [vmem:[%s691 + $0x18] sm:$0xff]
      %696 = vst [vmem:[#allocation1] ss:$2 sm:$0xff] %v171
      %s697 = scalar_lea.vmem [#allocation1], 16
      %698 = vst [vmem:[%s697] ss:$2 sm:$0xff] %v172
      %v699 = vld.sshfl [vmem:[#allocation1] sm:$0xff pattern:$0x75316420]
      %v700 = vld.sshfl [vmem:[#allocation1 + $0x8] sm:$0xff pattern:$0x75316420]
      %v701 = vld.sshfl [vmem:[#allocation1 + $0x10] sm:$0xff pattern:$0x75316420]
      %702 = vrot.lane.b32.xlu0 %v699, 109
      %v703 = vpop.permute.xlu0 %702
      %704 = vrot.lane.b32.xlu0 %v700, 109
      %v705 = vpop.permute.xlu0 %704
      %706 = vrot.lane.b32.xlu0 %v701, 109
      %v707 = vpop.permute.xlu0 %706
      %vm708 = vcmask 891904
      %v709 = vsel %vm708, %v703, %v705
      %v710 = vsel %vm708, %v705, %v707
      %v712 = vsel %vm199, %v692, 0
      %v715 = vsel %vm199, %v693, 0
      %v718 = vsel %vm199, %v694, 0
      %v721 = vsel %vm199, %v695, 0
      %v723 = vsel %vm212, %v709, 0
      %v725 = vsel %vm212, %v710, 0
      %v727 = vsel %vm212, %v707, 0
      %729 = vmatpush.msra.mxu0 0.0
      %730 = vmatpush.msra.mxu0 0.0
      %731 = vmatpush.msra.mxu0 0.0
      %732 = vmatpush.msra.mxu0 0.0
      %733 = vmatpush.msra.mxu0 0.0
      %734 = vmatpush.msra.mxu0 0.0
      %735 = vmatpush.msra.mxu0 0.0
      %736 = vmatpush.msra.mxu0 0.0
      %737 = vmatpush.msra.mxu0 0.0
      %738 = vmatpush.msra.mxu0 0.0
      %739 = vmatpush.msra.mxu0 0.0
      %740 = vmatpush.msra.mxu0 0.0
      %741 = vmatpush.msra.mxu0 0.0
      %742 = vmatpush.msra.mxu0 0.0
      %743 = vmatpush.msra.mxu0 0.0
      %744 = vmatpush.msra.mxu0 %v723
      %745 = vmatmul.f32.gmra.mxu0 %v712
      %v746 = vpop.f32.mrf.mxu0
      %v747 = vadd.f32 0.0, %v746
      %748 = vmatmul.f32.gmra.mxu0 %v715
      %v749 = vpop.f32.mrf.mxu0
      %v750 = vadd.f32 0.0, %v749
      %751 = vmatmul.f32.gmra.mxu0 %v718
      %v752 = vpop.f32.mrf.mxu0
      %v753 = vadd.f32 0.0, %v752
      %754 = vmatmul.f32.gmra.mxu0 %v721
      %v755 = vpop.f32.mrf.mxu0
      %v756 = vadd.f32 0.0, %v755
      %757 = vdwg.mxu0
      %758 = vmatpush.msra.mxu0 0.0
      %759 = vmatpush.msra.mxu0 0.0
      %760 = vmatpush.msra.mxu0 0.0
      %761 = vmatpush.msra.mxu0 0.0
      %762 = vmatpush.msra.mxu0 0.0
      %763 = vmatpush.msra.mxu0 0.0
      %764 = vmatpush.msra.mxu0 0.0
      %765 = vmatpush.msra.mxu0 0.0
      %766 = vmatpush.msra.mxu0 0.0
      %767 = vmatpush.msra.mxu0 0.0
      %768 = vmatpush.msra.mxu0 0.0
      %769 = vmatpush.msra.mxu0 0.0
      %770 = vmatpush.msra.mxu0 0.0
      %771 = vmatpush.msra.mxu0 0.0
      %772 = vmatpush.msra.mxu0 0.0
      %773 = vmatpush.msra.mxu0 %v725
      %774 = vmatmul.f32.gmra.mxu0 %v712
      %v775 = vpop.f32.mrf.mxu0
      %v776 = vadd.f32 0.0, %v775
      %777 = vmatmul.f32.gmra.mxu0 %v715
      %v778 = vpop.f32.mrf.mxu0
      %v779 = vadd.f32 0.0, %v778
      %780 = vmatmul.f32.gmra.mxu0 %v718
      %v781 = vpop.f32.mrf.mxu0
      %v782 = vadd.f32 0.0, %v781
      %783 = vmatmul.f32.gmra.mxu0 %v721
      %v784 = vpop.f32.mrf.mxu0
      %v785 = vadd.f32 0.0, %v784
      %786 = vdwg.mxu0
      %787 = vmatpush.msra.mxu0 0.0
      %788 = vmatpush.msra.mxu0 0.0
      %789 = vmatpush.msra.mxu0 0.0
      %790 = vmatpush.msra.mxu0 0.0
      %791 = vmatpush.msra.mxu0 0.0
      %792 = vmatpush.msra.mxu0 0.0
      %793 = vmatpush.msra.mxu0 0.0
      %794 = vmatpush.msra.mxu0 0.0
      %795 = vmatpush.msra.mxu0 0.0
      %796 = vmatpush.msra.mxu0 0.0
      %797 = vmatpush.msra.mxu0 0.0
      %798 = vmatpush.msra.mxu0 0.0
      %799 = vmatpush.msra.mxu0 0.0
      %800 = vmatpush.msra.mxu0 0.0
      %801 = vmatpush.msra.mxu0 0.0
      %802 = vmatpush.msra.mxu0 %v727
      %803 = vmatmul.f32.gmra.mxu0 %v712
      %v804 = vpop.f32.mrf.mxu0
      %v805 = vadd.f32 0.0, %v804
      %806 = vmatmul.f32.gmra.mxu0 %v715
      %v807 = vpop.f32.mrf.mxu0
      %v808 = vadd.f32 0.0, %v807
      %809 = vmatmul.f32.gmra.mxu0 %v718
      %v810 = vpop.f32.mrf.mxu0
      %v811 = vadd.f32 0.0, %v810
      %812 = vmatmul.f32.gmra.mxu0 %v721
      %v813 = vpop.f32.mrf.mxu0
      %v814 = vadd.f32 0.0, %v813
      %815 = vdwg.mxu0
      %v816 = vadd.f32 %v679, %v747
      %v817 = vadd.f32 %v680, %v776
      %v818 = vadd.f32 %v681, %v805
      %v819 = vadd.f32 %v682, %v750
      %v820 = vadd.f32 %v683, %v779
      %v821 = vadd.f32 %v684, %v808
      %v822 = vadd.f32 %v685, %v753
      %v823 = vadd.f32 %v686, %v782
      %v824 = vadd.f32 %v687, %v811
      %v825 = vadd.f32 %v688, %v756
      %v826 = vadd.f32 %v689, %v785
      %v827 = vadd.f32 %v690, %v814
      %s828 = scalar_lea.vmem %s1, 160
      %v829 = vld [vmem:[%s828] sm:$0xff]
      %v830 = vld [vmem:[%s828 + $0x8] sm:$0xff]
      %v831 = vld [vmem:[%s828 + $0x10] sm:$0xff]
      %v832 = vld [vmem:[%s828 + $0x18] sm:$0xff]
      %833 = vst [vmem:[#allocation1] ss:$2 sm:$0xff] %v171
      %s834 = scalar_lea.vmem [#allocation1], 16
      %835 = vst [vmem:[%s834] ss:$2 sm:$0xff] %v172
      %v836 = vld.sshfl [vmem:[#allocation1] sm:$0xff pattern:$0x75316420]
      %v837 = vld.sshfl [vmem:[#allocation1 + $0x8] sm:$0xff pattern:$0x75316420]
      %v838 = vld.sshfl [vmem:[#allocation1 + $0x10] sm:$0xff pattern:$0x75316420]
      %839 = vrot.lane.b32.xlu0 %v836, 108
      %v840 = vpop.permute.xlu0 %839
      %841 = vrot.lane.b32.xlu0 %v837, 108
      %v842 = vpop.permute.xlu0 %841
      %843 = vrot.lane.b32.xlu0 %v838, 108
      %v844 = vpop.permute.xlu0 %843
      %vm845 = vcmask 883712
      %v846 = vsel %vm845, %v840, %v842
      %v847 = vsel %vm845, %v842, %v844
      %v849 = vsel %vm199, %v829, 0
      %v852 = vsel %vm199, %v830, 0
      %v855 = vsel %vm199, %v831, 0
      %v858 = vsel %vm199, %v832, 0
      %v860 = vsel %vm212, %v846, 0
      %v862 = vsel %vm212, %v847, 0
      %v864 = vsel %vm212, %v844, 0
      %866 = vmatpush.msra.mxu0 0.0
      %867 = vmatpush.msra.mxu0 0.0
      %868 = vmatpush.msra.mxu0 0.0
      %869 = vmatpush.msra.mxu0 0.0
      %870 = vmatpush.msra.mxu0 0.0
      %871 = vmatpush.msra.mxu0 0.0
      %872 = vmatpush.msra.mxu0 0.0
      %873 = vmatpush.msra.mxu0 0.0
      %874 = vmatpush.msra.mxu0 0.0
      %875 = vmatpush.msra.mxu0 0.0
      %876 = vmatpush.msra.mxu0 0.0
      %877 = vmatpush.msra.mxu0 0.0
      %878 = vmatpush.msra.mxu0 0.0
      %879 = vmatpush.msra.mxu0 0.0
      %880 = vmatpush.msra.mxu0 0.0
      %881 = vmatpush.msra.mxu0 %v860
      %882 = vmatmul.f32.gmra.mxu0 %v849
      %v883 = vpop.f32.mrf.mxu0
      %v884 = vadd.f32 0.0, %v883
      %885 = vmatmul.f32.gmra.mxu0 %v852
      %v886 = vpop.f32.mrf.mxu0
      %v887 = vadd.f32 0.0, %v886
      %888 = vmatmul.f32.gmra.mxu0 %v855
      %v889 = vpop.f32.mrf.mxu0
      %v890 = vadd.f32 0.0, %v889
      %891 = vmatmul.f32.gmra.mxu0 %v858
      %v892 = vpop.f32.mrf.mxu0
      %v893 = vadd.f32 0.0, %v892
      %894 = vdwg.mxu0
      %895 = vmatpush.msra.mxu0 0.0
      %896 = vmatpush.msra.mxu0 0.0
      %897 = vmatpush.msra.mxu0 0.0
      %898 = vmatpush.msra.mxu0 0.0
      %899 = vmatpush.msra.mxu0 0.0
      %900 = vmatpush.msra.mxu0 0.0
      %901 = vmatpush.msra.mxu0 0.0
      %902 = vmatpush.msra.mxu0 0.0
      %903 = vmatpush.msra.mxu0 0.0
      %904 = vmatpush.msra.mxu0 0.0
      %905 = vmatpush.msra.mxu0 0.0
      %906 = vmatpush.msra.mxu0 0.0
      %907 = vmatpush.msra.mxu0 0.0
      %908 = vmatpush.msra.mxu0 0.0
      %909 = vmatpush.msra.mxu0 0.0
      %910 = vmatpush.msra.mxu0 %v862
      %911 = vmatmul.f32.gmra.mxu0 %v849
      %v912 = vpop.f32.mrf.mxu0
      %v913 = vadd.f32 0.0, %v912
      %914 = vmatmul.f32.gmra.mxu0 %v852
      %v915 = vpop.f32.mrf.mxu0
      %v916 = vadd.f32 0.0, %v915
      %917 = vmatmul.f32.gmra.mxu0 %v855
      %v918 = vpop.f32.mrf.mxu0
      %v919 = vadd.f32 0.0, %v918
      %920 = vmatmul.f32.gmra.mxu0 %v858
      %v921 = vpop.f32.mrf.mxu0
      %v922 = vadd.f32 0.0, %v921
      %923 = vdwg.mxu0
      %924 = vmatpush.msra.mxu0 0.0
      %925 = vmatpush.msra.mxu0 0.0
      %926 = vmatpush.msra.mxu0 0.0
      %927 = vmatpush.msra.mxu0 0.0
      %928 = vmatpush.msra.mxu0 0.0
      %929 = vmatpush.msra.mxu0 0.0
      %930 = vmatpush.msra.mxu0 0.0
      %931 = vmatpush.msra.mxu0 0.0
      %932 = vmatpush.msra.mxu0 0.0
      %933 = vmatpush.msra.mxu0 0.0
      %934 = vmatpush.msra.mxu0 0.0
      %935 = vmatpush.msra.mxu0 0.0
      %936 = vmatpush.msra.mxu0 0.0
      %937 = vmatpush.msra.mxu0 0.0
      %938 = vmatpush.msra.mxu0 0.0
      %939 = vmatpush.msra.mxu0 %v864
      %940 = vmatmul.f32.gmra.mxu0 %v849
      %v941 = vpop.f32.mrf.mxu0
      %v942 = vadd.f32 0.0, %v941
      %943 = vmatmul.f32.gmra.mxu0 %v852
      %v944 = vpop.f32.mrf.mxu0
      %v945 = vadd.f32 0.0, %v944
      %946 = vmatmul.f32.gmra.mxu0 %v855
      %v947 = vpop.f32.mrf.mxu0
      %v948 = vadd.f32 0.0, %v947
      %949 = vmatmul.f32.gmra.mxu0 %v858
      %v950 = vpop.f32.mrf.mxu0
      %v951 = vadd.f32 0.0, %v950
      %952 = vdwg.mxu0
      %v953 = vadd.f32 %v816, %v884
      %v954 = vadd.f32 %v817, %v913
      %v955 = vadd.f32 %v818, %v942
      %v956 = vadd.f32 %v819, %v887
      %v957 = vadd.f32 %v820, %v916
      %v958 = vadd.f32 %v821, %v945
      %v959 = vadd.f32 %v822, %v890
      %v960 = vadd.f32 %v823, %v919
      %v961 = vadd.f32 %v824, %v948
      %v962 = vadd.f32 %v825, %v893
      %v963 = vadd.f32 %v826, %v922
      %v964 = vadd.f32 %v827, %v951
      %s965 = scalar_lea.vmem %s1, 192
      %v966 = vld [vmem:[%s965] sm:$0xff]
      %v967 = vld [vmem:[%s965 + $0x8] sm:$0xff]
      %v968 = vld [vmem:[%s965 + $0x10] sm:$0xff]
      %v969 = vld [vmem:[%s965 + $0x18] sm:$0xff]
      %970 = vst [vmem:[#allocation1] ss:$2 sm:$0xff] %v171
      %s971 = scalar_lea.vmem [#allocation1], 16
      %972 = vst [vmem:[%s971] ss:$2 sm:$0xff] %v172
      %v973 = vld.sshfl [vmem:[#allocation1] sm:$0xff pattern:$0x75316420]
      %v974 = vld.sshfl [vmem:[#allocation1 + $0x8] sm:$0xff pattern:$0x75316420]
      %v975 = vld.sshfl [vmem:[#allocation1 + $0x10] sm:$0xff pattern:$0x75316420]
      %976 = vrot.lane.b32.xlu0 %v973, 92
      %v977 = vpop.permute.xlu0 %976
      %978 = vrot.lane.b32.xlu0 %v974, 92
      %v979 = vpop.permute.xlu0 %978
      %980 = vrot.lane.b32.xlu0 %v975, 92
      %v981 = vpop.permute.xlu0 %980
      %vm982 = vcmask 752640
      %v983 = vsel %vm982, %v977, %v979
      %v984 = vsel %vm982, %v979, %v981
      %v986 = vsel %vm199, %v966, 0
      %v989 = vsel %vm199, %v967, 0
      %v992 = vsel %vm199, %v968, 0
      %v995 = vsel %vm199, %v969, 0
      %v997 = vsel %vm212, %v983, 0
      %v999 = vsel %vm212, %v984, 0
      %v1001 = vsel %vm212, %v981, 0
      %1003 = vmatpush.msra.mxu0 0.0
      %1004 = vmatpush.msra.mxu0 0.0
      %1005 = vmatpush.msra.mxu0 0.0
      %1006 = vmatpush.msra.mxu0 0.0
      %1007 = vmatpush.msra.mxu0 0.0
      %1008 = vmatpush.msra.mxu0 0.0
      %1009 = vmatpush.msra.mxu0 0.0
      %1010 = vmatpush.msra.mxu0 0.0
      %1011 = vmatpush.msra.mxu0 0.0
      %1012 = vmatpush.msra.mxu0 0.0
      %1013 = vmatpush.msra.mxu0 0.0
      %1014 = vmatpush.msra.mxu0 0.0
      %1015 = vmatpush.msra.mxu0 0.0
      %1016 = vmatpush.msra.mxu0 0.0
      %1017 = vmatpush.msra.mxu0 0.0
      %1018 = vmatpush.msra.mxu0 %v997
      %1019 = vmatmul.f32.gmra.mxu0 %v986
      %v1020 = vpop.f32.mrf.mxu0
      %v1021 = vadd.f32 0.0, %v1020
      %1022 = vmatmul.f32.gmra.mxu0 %v989
      %v1023 = vpop.f32.mrf.mxu0
      %v1024 = vadd.f32 0.0, %v1023
      %1025 = vmatmul.f32.gmra.mxu0 %v992
      %v1026 = vpop.f32.mrf.mxu0
      %v1027 = vadd.f32 0.0, %v1026
      %1028 = vmatmul.f32.gmra.mxu0 %v995
      %v1029 = vpop.f32.mrf.mxu0
      %v1030 = vadd.f32 0.0, %v1029
      %1031 = vdwg.mxu0
      %1032 = vmatpush.msra.mxu0 0.0
      %1033 = vmatpush.msra.mxu0 0.0
      %1034 = vmatpush.msra.mxu0 0.0
      %1035 = vmatpush.msra.mxu0 0.0
      %1036 = vmatpush.msra.mxu0 0.0
      %1037 = vmatpush.msra.mxu0 0.0
      %1038 = vmatpush.msra.mxu0 0.0
      %1039 = vmatpush.msra.mxu0 0.0
      %1040 = vmatpush.msra.mxu0 0.0
      %1041 = vmatpush.msra.mxu0 0.0
      %1042 = vmatpush.msra.mxu0 0.0
      %1043 = vmatpush.msra.mxu0 0.0
      %1044 = vmatpush.msra.mxu0 0.0
      %1045 = vmatpush.msra.mxu0 0.0
      %1046 = vmatpush.msra.mxu0 0.0
      %1047 = vmatpush.msra.mxu0 %v999
      %1048 = vmatmul.f32.gmra.mxu0 %v986
      %v1049 = vpop.f32.mrf.mxu0
      %v1050 = vadd.f32 0.0, %v1049
      %1051 = vmatmul.f32.gmra.mxu0 %v989
      %v1052 = vpop.f32.mrf.mxu0
      %v1053 = vadd.f32 0.0, %v1052
      %1054 = vmatmul.f32.gmra.mxu0 %v992
      %v1055 = vpop.f32.mrf.mxu0
      %v1056 = vadd.f32 0.0, %v1055
      %1057 = vmatmul.f32.gmra.mxu0 %v995
      %v1058 = vpop.f32.mrf.mxu0
      %v1059 = vadd.f32 0.0, %v1058
      %1060 = vdwg.mxu0
      %1061 = vmatpush.msra.mxu0 0.0
      %1062 = vmatpush.msra.mxu0 0.0
      %1063 = vmatpush.msra.mxu0 0.0
      %1064 = vmatpush.msra.mxu0 0.0
      %1065 = vmatpush.msra.mxu0 0.0
      %1066 = vmatpush.msra.mxu0 0.0
      %1067 = vmatpush.msra.mxu0 0.0
      %1068 = vmatpush.msra.mxu0 0.0
      %1069 = vmatpush.msra.mxu0 0.0
      %1070 = vmatpush.msra.mxu0 0.0
      %1071 = vmatpush.msra.mxu0 0.0
      %1072 = vmatpush.msra.mxu0 0.0
      %1073 = vmatpush.msra.mxu0 0.0
      %1074 = vmatpush.msra.mxu0 0.0
      %1075 = vmatpush.msra.mxu0 0.0
      %1076 = vmatpush.msra.mxu0 %v1001
      %1077 = vmatmul.f32.gmra.mxu0 %v986
      %v1078 = vpop.f32.mrf.mxu0
      %v1079 = vadd.f32 0.0, %v1078
      %1080 = vmatmul.f32.gmra.mxu0 %v989
      %v1081 = vpop.f32.mrf.mxu0
      %v1082 = vadd.f32 0.0, %v1081
      %1083 = vmatmul.f32.gmra.mxu0 %v992
      %v1084 = vpop.f32.mrf.mxu0
      %v1085 = vadd.f32 0.0, %v1084
      %1086 = vmatmul.f32.gmra.mxu0 %v995
      %v1087 = vpop.f32.mrf.mxu0
      %v1088 = vadd.f32 0.0, %v1087
      %1089 = vdwg.mxu0
      %v1090 = vadd.f32 %v953, %v1021
      %v1091 = vadd.f32 %v954, %v1050
      %v1092 = vadd.f32 %v955, %v1079
      %v1093 = vadd.f32 %v956, %v1024
      %v1094 = vadd.f32 %v957, %v1053
      %v1095 = vadd.f32 %v958, %v1082
      %v1096 = vadd.f32 %v959, %v1027
      %v1097 = vadd.f32 %v960, %v1056
      %v1098 = vadd.f32 %v961, %v1085
      %v1099 = vadd.f32 %v962, %v1030
      %v1100 = vadd.f32 %v963, %v1059
      %v1101 = vadd.f32 %v964, %v1088
      %s1102 = scalar_lea.vmem %s1, 224
      %v1103 = vld [vmem:[%s1102] sm:$0xff]
      %v1104 = vld [vmem:[%s1102 + $0x8] sm:$0xff]
      %v1105 = vld [vmem:[%s1102 + $0x10] sm:$0xff]
      %v1106 = vld [vmem:[%s1102 + $0x18] sm:$0xff]
      %1107 = vst [vmem:[#allocation1] ss:$2 sm:$0xff] %v171
      %s1108 = scalar_lea.vmem [#allocation1], 16
      %1109 = vst [vmem:[%s1108] ss:$2 sm:$0xff] %v172
      %v1110 = vld.sshfl [vmem:[#allocation1] sm:$0xff pattern:$0x75316420]
      %v1111 = vld.sshfl [vmem:[#allocation1 + $0x8] sm:$0xff pattern:$0x75316420]
      %v1112 = vld.sshfl [vmem:[#allocation1 + $0x10] sm:$0xff pattern:$0x75316420]
      %1113 = vrot.lane.b32.xlu0 %v1110, 91
      %v1114 = vpop.permute.xlu0 %1113
      %1115 = vrot.lane.b32.xlu0 %v1111, 91
      %v1116 = vpop.permute.xlu0 %1115
      %1117 = vrot.lane.b32.xlu0 %v1112, 91
      %v1118 = vpop.permute.xlu0 %1117
      %vm1119 = vcmask 744448
      %v1120 = vsel %vm1119, %v1114, %v1116
      %v1121 = vsel %vm1119, %v1116, %v1118
      %v1123 = vsel %vm199, %v1103, 0
      %v1126 = vsel %vm199, %v1104, 0
      %v1129 = vsel %vm199, %v1105, 0
      %v1132 = vsel %vm199, %v1106, 0
      %v1134 = vsel %vm212, %v1120, 0
      %v1136 = vsel %vm212, %v1121, 0
      %v1138 = vsel %vm212, %v1118, 0
      %1140 = vmatpush.msra.mxu0 0.0
      %1141 = vmatpush.msra.mxu0 0.0
      %1142 = vmatpush.msra.mxu0 0.0
      %1143 = vmatpush.msra.mxu0 0.0
      %1144 = vmatpush.msra.mxu0 0.0
      %1145 = vmatpush.msra.mxu0 0.0
      %1146 = vmatpush.msra.mxu0 0.0
      %1147 = vmatpush.msra.mxu0 0.0
      %1148 = vmatpush.msra.mxu0 0.0
      %1149 = vmatpush.msra.mxu0 0.0
      %1150 = vmatpush.msra.mxu0 0.0
      %1151 = vmatpush.msra.mxu0 0.0
      %1152 = vmatpush.msra.mxu0 0.0
      %1153 = vmatpush.msra.mxu0 0.0
      %1154 = vmatpush.msra.mxu0 0.0
      %1155 = vmatpush.msra.mxu0 %v1134
      %1156 = vmatmul.f32.gmra.mxu0 %v1123
      %v1157 = vpop.f32.mrf.mxu0
      %v1158 = vadd.f32 0.0, %v1157
      %1159 = vmatmul.f32.gmra.mxu0 %v1126
      %v1160 = vpop.f32.mrf.mxu0
      %v1161 = vadd.f32 0.0, %v1160
      %1162 = vmatmul.f32.gmra.mxu0 %v1129
      %v1163 = vpop.f32.mrf.mxu0
      %v1164 = vadd.f32 0.0, %v1163
      %1165 = vmatmul.f32.gmra.mxu0 %v1132
      %v1166 = vpop.f32.mrf.mxu0
      %v1167 = vadd.f32 0.0, %v1166
      %1168 = vdwg.mxu0
      %1169 = vmatpush.msra.mxu0 0.0
      %1170 = vmatpush.msra.mxu0 0.0
      %1171 = vmatpush.msra.mxu0 0.0
      %1172 = vmatpush.msra.mxu0 0.0
      %1173 = vmatpush.msra.mxu0 0.0
      %1174 = vmatpush.msra.mxu0 0.0
      %1175 = vmatpush.msra.mxu0 0.0
      %1176 = vmatpush.msra.mxu0 0.0
      %1177 = vmatpush.msra.mxu0 0.0
      %1178 = vmatpush.msra.mxu0 0.0
      %1179 = vmatpush.msra.mxu0 0.0
      %1180 = vmatpush.msra.mxu0 0.0
      %1181 = vmatpush.msra.mxu0 0.0
      %1182 = vmatpush.msra.mxu0 0.0
      %1183 = vmatpush.msra.mxu0 0.0
      %1184 = vmatpush.msra.mxu0 %v1136
      %1185 = vmatmul.f32.gmra.mxu0 %v1123
      %v1186 = vpop.f32.mrf.mxu0
      %v1187 = vadd.f32 0.0, %v1186
      %1188 = vmatmul.f32.gmra.mxu0 %v1126
      %v1189 = vpop.f32.mrf.mxu0
      %v1190 = vadd.f32 0.0, %v1189
      %1191 = vmatmul.f32.gmra.mxu0 %v1129
      %v1192 = vpop.f32.mrf.mxu0
      %v1193 = vadd.f32 0.0, %v1192
      %1194 = vmatmul.f32.gmra.mxu0 %v1132
      %v1195 = vpop.f32.mrf.mxu0
      %v1196 = vadd.f32 0.0, %v1195
      %1197 = vdwg.mxu0
      %1198 = vmatpush.msra.mxu0 0.0
      %1199 = vmatpush.msra.mxu0 0.0
      %1200 = vmatpush.msra.mxu0 0.0
      %1201 = vmatpush.msra.mxu0 0.0
      %1202 = vmatpush.msra.mxu0 0.0
      %1203 = vmatpush.msra.mxu0 0.0
      %1204 = vmatpush.msra.mxu0 0.0
      %1205 = vmatpush.msra.mxu0 0.0
      %1206 = vmatpush.msra.mxu0 0.0
      %1207 = vmatpush.msra.mxu0 0.0
      %1208 = vmatpush.msra.mxu0 0.0
      %1209 = vmatpush.msra.mxu0 0.0
      %1210 = vmatpush.msra.mxu0 0.0
      %1211 = vmatpush.msra.mxu0 0.0
      %1212 = vmatpush.msra.mxu0 0.0
      %1213 = vmatpush.msra.mxu0 %v1138
      %1214 = vmatmul.f32.gmra.mxu0 %v1123
      %v1215 = vpop.f32.mrf.mxu0
      %v1216 = vadd.f32 0.0, %v1215
      %1217 = vmatmul.f32.gmra.mxu0 %v1126
      %v1218 = vpop.f32.mrf.mxu0
      %v1219 = vadd.f32 0.0, %v1218
      %1220 = vmatmul.f32.gmra.mxu0 %v1129
      %v1221 = vpop.f32.mrf.mxu0
      %v1222 = vadd.f32 0.0, %v1221
      %1223 = vmatmul.f32.gmra.mxu0 %v1132
      %v1224 = vpop.f32.mrf.mxu0
      %v1225 = vadd.f32 0.0, %v1224
      %1226 = vdwg.mxu0
      %v1227 = vadd.f32 %v1090, %v1158
      %v1228 = vadd.f32 %v1091, %v1187
      %v1229 = vadd.f32 %v1092, %v1216
      %v1230 = vadd.f32 %v1093, %v1161
      %v1231 = vadd.f32 %v1094, %v1190
      %v1232 = vadd.f32 %v1095, %v1219
      %v1233 = vadd.f32 %v1096, %v1164
      %v1234 = vadd.f32 %v1097, %v1193
      %v1235 = vadd.f32 %v1098, %v1222
      %v1236 = vadd.f32 %v1099, %v1167
      %v1237 = vadd.f32 %v1100, %v1196
      %v1238 = vadd.f32 %v1101, %v1225
      %s1239 = scalar_lea.vmem %s1, 256
      %v1240 = vld [vmem:[%s1239] sm:$0xff]
      %v1241 = vld [vmem:[%s1239 + $0x8] sm:$0xff]
      %v1242 = vld [vmem:[%s1239 + $0x10] sm:$0xff]
      %v1243 = vld [vmem:[%s1239 + $0x18] sm:$0xff]
      %1244 = vst [vmem:[#allocation1] ss:$2 sm:$0xff] %v171
      %s1245 = scalar_lea.vmem [#allocation1], 16
      %1246 = vst [vmem:[%s1245] ss:$2 sm:$0xff] %v172
      %v1247 = vld.sshfl [vmem:[#allocation1] sm:$0xff pattern:$0x75316420]
      %v1248 = vld.sshfl [vmem:[#allocation1 + $0x8] sm:$0xff pattern:$0x75316420]
      %v1249 = vld.sshfl [vmem:[#allocation1 + $0x10] sm:$0xff pattern:$0x75316420]
      %1250 = vrot.lane.b32.xlu0 %v1247, 90
      %v1251 = vpop.permute.xlu0 %1250
      %1252 = vrot.lane.b32.xlu0 %v1248, 90
      %v1253 = vpop.permute.xlu0 %1252
      %1254 = vrot.lane.b32.xlu0 %v1249, 90
      %v1255 = vpop.permute.xlu0 %1254
      %vm1256 = vcmask 736256
      %v1257 = vsel %vm1256, %v1251, %v1253
      %v1258 = vsel %vm1256, %v1253, %v1255
      %v1260 = vsel %vm199, %v1240, 0
      %v1263 = vsel %vm199, %v1241, 0
      %v1266 = vsel %vm199, %v1242, 0
      %v1269 = vsel %vm199, %v1243, 0
      %v1271 = vsel %vm212, %v1257, 0
      %v1273 = vsel %vm212, %v1258, 0
      %v1275 = vsel %vm212, %v1255, 0
      %1277 = vmatpush.msra.mxu0 0.0
      %1278 = vmatpush.msra.mxu0 0.0
      %1279 = vmatpush.msra.mxu0 0.0
      %1280 = vmatpush.msra.mxu0 0.0
      %1281 = vmatpush.msra.mxu0 0.0
      %1282 = vmatpush.msra.mxu0 0.0
      %1283 = vmatpush.msra.mxu0 0.0
      %1284 = vmatpush.msra.mxu0 0.0
      %1285 = vmatpush.msra.mxu0 0.0
      %1286 = vmatpush.msra.mxu0 0.0
      %1287 = vmatpush.msra.mxu0 0.0
      %1288 = vmatpush.msra.mxu0 0.0
      %1289 = vmatpush.msra.mxu0 0.0
      %1290 = vmatpush.msra.mxu0 0.0
      %1291 = vmatpush.msra.mxu0 0.0
      %1292 = vmatpush.msra.mxu0 %v1271
      %1293 = vmatmul.f32.gmra.mxu0 %v1260
      %v1294 = vpop.f32.mrf.mxu0
      %v1295 = vadd.f32 0.0, %v1294
      %1296 = vmatmul.f32.gmra.mxu0 %v1263
      %v1297 = vpop.f32.mrf.mxu0
      %v1298 = vadd.f32 0.0, %v1297
      %1299 = vmatmul.f32.gmra.mxu0 %v1266
      %v1300 = vpop.f32.mrf.mxu0
      %v1301 = vadd.f32 0.0, %v1300
      %1302 = vmatmul.f32.gmra.mxu0 %v1269
      %v1303 = vpop.f32.mrf.mxu0
      %v1304 = vadd.f32 0.0, %v1303
      %1305 = vdwg.mxu0
      %1306 = vmatpush.msra.mxu0 0.0
      %1307 = vmatpush.msra.mxu0 0.0
      %1308 = vmatpush.msra.mxu0 0.0
      %1309 = vmatpush.msra.mxu0 0.0
      %1310 = vmatpush.msra.mxu0 0.0
      %1311 = vmatpush.msra.mxu0 0.0
      %1312 = vmatpush.msra.mxu0 0.0
      %1313 = vmatpush.msra.mxu0 0.0
      %1314 = vmatpush.msra.mxu0 0.0
      %1315 = vmatpush.msra.mxu0 0.0
      %1316 = vmatpush.msra.mxu0 0.0
      %1317 = vmatpush.msra.mxu0 0.0
      %1318 = vmatpush.msra.mxu0 0.0
      %1319 = vmatpush.msra.mxu0 0.0
      %1320 = vmatpush.msra.mxu0 0.0
      %1321 = vmatpush.msra.mxu0 %v1273
      %1322 = vmatmul.f32.gmra.mxu0 %v1260
      %v1323 = vpop.f32.mrf.mxu0
      %v1324 = vadd.f32 0.0, %v1323
      %1325 = vmatmul.f32.gmra.mxu0 %v1263
      %v1326 = vpop.f32.mrf.mxu0
      %v1327 = vadd.f32 0.0, %v1326
      %1328 = vmatmul.f32.gmra.mxu0 %v1266
      %v1329 = vpop.f32.mrf.mxu0
      %v1330 = vadd.f32 0.0, %v1329
      %1331 = vmatmul.f32.gmra.mxu0 %v1269
      %v1332 = vpop.f32.mrf.mxu0
      %v1333 = vadd.f32 0.0, %v1332
      %1334 = vdwg.mxu0
      %1335 = vmatpush.msra.mxu0 0.0
      %1336 = vmatpush.msra.mxu0 0.0
      %1337 = vmatpush.msra.mxu0 0.0
      %1338 = vmatpush.msra.mxu0 0.0
      %1339 = vmatpush.msra.mxu0 0.0
      %1340 = vmatpush.msra.mxu0 0.0
      %1341 = vmatpush.msra.mxu0 0.0
      %1342 = vmatpush.msra.mxu0 0.0
      %1343 = vmatpush.msra.mxu0 0.0
      %1344 = vmatpush.msra.mxu0 0.0
      %1345 = vmatpush.msra.mxu0 0.0
      %1346 = vmatpush.msra.mxu0 0.0
      %1347 = vmatpush.msra.mxu0 0.0
      %1348 = vmatpush.msra.mxu0 0.0
      %1349 = vmatpush.msra.mxu0 0.0
      %1350 = vmatpush.msra.mxu0 %v1275
      %1351 = vmatmul.f32.gmra.mxu0 %v1260
      %v1352 = vpop.f32.mrf.mxu0
      %v1353 = vadd.f32 0.0, %v1352
      %1354 = vmatmul.f32.gmra.mxu0 %v1263
      %v1355 = vpop.f32.mrf.mxu0
      %v1356 = vadd.f32 0.0, %v1355
      %1357 = vmatmul.f32.gmra.mxu0 %v1266
      %v1358 = vpop.f32.mrf.mxu0
      %v1359 = vadd.f32 0.0, %v1358
      %1360 = vmatmul.f32.gmra.mxu0 %v1269
      %v1361 = vpop.f32.mrf.mxu0
      %v1362 = vadd.f32 0.0, %v1361
      %1363 = vdwg.mxu0
      %v1364 = vadd.f32 %v1227, %v1295
      %v1365 = vadd.f32 %v1228, %v1324
      %v1366 = vadd.f32 %v1229, %v1353
      %v1367 = vadd.f32 %v1230, %v1298
      %v1368 = vadd.f32 %v1231, %v1327
      %v1369 = vadd.f32 %v1232, %v1356
      %v1370 = vadd.f32 %v1233, %v1301
      %v1371 = vadd.f32 %v1234, %v1330
      %v1372 = vadd.f32 %v1235, %v1359
      %v1373 = vadd.f32 %v1236, %v1304
      %v1374 = vadd.f32 %v1237, %v1333
      %v1375 = vadd.f32 %v1238, %v1362
      %v1376 = vld [vmem:[%s2] sm:$0xff]
      %v1377 = vld [vmem:[%s2 + $0x8] sm:$0xff]
      %v1378 = vld [vmem:[%s2 + $0x10] sm:$0xff]
      %v1379 = vld [vmem:[%s2 + $0x18] sm:$0xff]
      %1381 = vset.pattern.permute.xlu0 0
      %1382 = vperm.xlu0 %1381, %v1376
      %v1383 = vpop.permute.xlu0 %1382
      %1386 = vset.pattern.permute.xlu0 0
      %1387 = vperm.xlu0 %1386, %v1377
      %v1388 = vpop.permute.xlu0 %1387
      %1391 = vset.pattern.permute.xlu0 0
      %1392 = vperm.xlu0 %1391, %v1378
      %v1393 = vpop.permute.xlu0 %1392
      %1396 = vset.pattern.permute.xlu0 0
      %1397 = vperm.xlu0 %1396, %v1379
      %v1398 = vpop.permute.xlu0 %1397
      %v1400 = vadd.f32 %v1364, %v1383
      %v1401 = vadd.f32 %v1365, %v1383
      %v1402 = vadd.f32 %v1366, %v1383
      %v1403 = vadd.f32 %v1367, %v1388
      %v1404 = vadd.f32 %v1368, %v1388
      %v1405 = vadd.f32 %v1369, %v1388
      %v1406 = vadd.f32 %v1370, %v1393
      %v1407 = vadd.f32 %v1371, %v1393
      %v1408 = vadd.f32 %v1372, %v1393
      %v1409 = vadd.f32 %v1373, %v1398
      %v1410 = vadd.f32 %v1374, %v1398
      %v1411 = vadd.f32 %v1375, %v1398
      %v1412 = vmax.f32 %v1400, 0.0
      %v1413 = vmax.f32 %v1401, 0.0
      %v1414 = vmax.f32 %v1402, 0.0
      %v1415 = vmax.f32 %v1403, 0.0
      %v1416 = vmax.f32 %v1404, 0.0
      %v1417 = vmax.f32 %v1405, 0.0
      %v1418 = vmax.f32 %v1406, 0.0
      %v1419 = vmax.f32 %v1407, 0.0
      %v1420 = vmax.f32 %v1408, 0.0
      %v1421 = vmax.f32 %v1409, 0.0
      %v1422 = vmax.f32 %v1410, 0.0
      %v1423 = vmax.f32 %v1411, 0.0
      %1424 = vst [vmem:[%s170] sm:$0xff] %v1412
      %1425 = vst [vmem:[%s170 + $0x8] sm:$0xff] %v1413
      %vm1426 = vcmask 261120
      %1427 = vst.msk [vmem:[%s170 + $0x10] sm:$0xff] %vm1426, %v1414
      %1428 = vst [vmem:[%s170 + $0x18] sm:$0xff] %v1415
      %1429 = vst [vmem:[%s170 + $0x20] sm:$0xff] %v1416
      %1430 = vst.msk [vmem:[%s170 + $0x28] sm:$0xff] %vm1426, %v1417
      %1431 = vst [vmem:[%s170 + $0x30] sm:$0xff] %v1418
      %1432 = vst [vmem:[%s170 + $0x38] sm:$0xff] %v1419
      %1433 = vst.msk [vmem:[%s170 + $0x40] sm:$0xff] %vm1426, %v1420
      %1434 = vst [vmem:[%s170 + $0x48] sm:$0xff] %v1421
      %1435 = vst [vmem:[%s170 + $0x50] sm:$0xff] %v1422
      %1436 = vst.msk [vmem:[%s170 + $0x58] sm:$0xff] %vm1426, %v1423
      %p1437 = scmp.lt.s32.totalorder %s14, 1
      %s1438 = scalar_select %p1437, %s14, 1
      %s1439 = smul.addr %s1438, 12
      %s1440 = smul.addr %s1439, 8
      %s1441 = scalar_lea.vmem %s3, %s1440
      // Predicated region
      $region33: #{conv_block_forward.1} parent=31 // pred_check
        %p1442 = pneg %p100
      $region34: #{conv_block_forward.1} parent=31 // pred_check_branch
        %1444 = sbr.rel (%p1442) target = $region36
      $region35: #{conv_block_forward.1} parent=31 // pred_region
        _
      $region36: #{conv_block_forward.1} parent=31 // pred_fallthru
        _
    $region32: #{conv_block_forward.1} parent=5 // pred_fallthru
      _
    %p1445 = scmp.le.s32.totalorder 2, %s9
    // Predicated region
    $region37: #{conv_block_forward.1} parent=5 // pred_check
      %p1446 = pneg %p1445
    $region38: #{conv_block_forward.1} parent=5 // pred_check_branch
      %1448 = sbr.rel (%p1446) target = $region40
    $region39: #{conv_block_forward.1} parent=5 // pred_region
      %s1449 = ssub.s32 %s9, 2
      // Predicated region
      $region41: #{conv_block_forward.1} parent=39 // pred_check
        %p1450 = pneg %p106
      $region42: #{conv_block_forward.1} parent=39 // pred_check_branch
        %1452 = sbr.rel (%p1450) target = $region44
      $region43: #{conv_block_forward.1} parent=39 // pred_region
        %p1453 = scmp.lt.s32.totalorder %s15, 1
        %s1454 = scalar_select %p1453, %s15, 1
        %s1455 = smul.addr %s1454, 12
        %s1456 = smul.addr %s1455, 8
        %s1457 = scalar_lea.vmem %s3, %s1456
      $region44: #{conv_block_forward.1} parent=39 // pred_fallthru
        _
    $region40: #{conv_block_forward.1} parent=5 // pred_fallthru
      _
  $region6: #{conv_block_forward.1} parent=0 // loop_footer
    %s13 = sadd.s32 1, %s9
  $region7: #{conv_block_forward.1} parent=0 // loop_footer_branch
    %8 = sbr.rel target = $region3
  $region8: #{conv_block_forward.1} parent=0 // loop_exit
    _

</llo_original>
